<compile_context>
chip_gen: v7x
topology: tpu7x:2x2x1
jax: 0.10.0
libtpu: 0.0.40
codegen_flags: <defaults>
</compile_context>

<pallas_src>
import functools

import jax
import jax.numpy as jnp
from jax.experimental import pallas as pl
from jax.experimental.pallas import tpu as pltpu


def _round_up(x, m):
    return (x + m - 1) // m * m


def _pointconv_kernel(diff_ref, mask_ref, basis_ref, wl_ref, bl_ref,
                      wg_ref, bg_ref, out_ref, acc_ref):
    """One (destination-tile, neighbor-chunk) grid step."""
    k = pl.program_id(1)
    neg = jnp.float32(-jnp.inf)

    @pl.when(k == 0)
    def _():
        acc_ref[...] = jnp.full(acc_ref.shape, neg, dtype=acc_ref.dtype)

    tm, tk, dp = diff_ref.shape
    hp = acc_ref.shape[-1]

    # Per-edge geometry -> Fourier features -> local_nn (Linear + ReLU).
    d2 = diff_ref[...].reshape(tm * tk, dp)                         # (TM*TK, Dp)
    emb = jnp.dot(d2.astype(basis_ref.dtype), basis_ref[...],
                  preferred_element_type=jnp.float32)               # (TM*TK, F)
    feat = jnp.concatenate([d2, jnp.sin(emb), jnp.cos(emb)], axis=1)
    h = jnp.dot(feat.astype(wl_ref.dtype), wl_ref[...],
                preferred_element_type=jnp.float32) + bl_ref[...]
    h = jnp.maximum(h, 0.0)                                         # (TM*TK, Hp)

    # Segment max for this neighbor chunk: padded slots carry -inf, so a plain
    # axis-max over the chunk dimension is the scatter_max contribution.
    h = h.reshape(tm, tk, hp) + mask_ref[...]
    acc_ref[...] = jnp.maximum(acc_ref[...], jnp.max(h, axis=1))

    # global_nn (Linear) once per destination tile, after all chunks.
    @pl.when(k == pl.num_programs(1) - 1)
    def _():
        out_ref[...] = (jnp.dot(acc_ref[...].astype(wg_ref.dtype), wg_ref[...],
                                preferred_element_type=jnp.float32)
                        + bg_ref[...]).astype(out_ref.dtype)


@functools.partial(
    jax.jit,
    static_argnames=("dim_size", "max_degree", "tile_m", "tile_k", "use_bf16"))
def pointconv(pos, pos_dst, edge_index, basis, wl, bl, wg, bg, *,
              dim_size, max_degree, tile_m=8, tile_k=8, use_bf16=False):
    """Pallas PointConv forward.

    pos:        (N, D) f32 source positions
    pos_dst:    (M, D) f32 destination positions
    edge_index: (2, E) int32 [row; col]
    basis:      (D, F) f32 Fourier basis
    local_nn  = Linear(D + 2F, H) + ReLU   (wl, bl)
    global_nn = Linear(H, Hout)            (wg, bg)
    dim_size, max_degree: static Python ints (mirror of torch's
                          `col.max().item() + 1` host sync).
    returns:    (dim_size, Hout) f32
    """
    N, D = pos.shape
    M = int(dim_size)
    E = edge_index.shape[1]
    F = basis.shape[1]
    H = wl.shape[1]
    Hout = wg.shape[1]

    d_pad = _round_up(D, 8)
    h_pad = _round_up(H, 128)
    hout_pad = _round_up(Hout, 128)
    m_pad = _round_up(M, tile_m)
    k_pad = _round_up(max(int(max_degree), 1), tile_k)

    row = edge_index[0].astype(jnp.int32)
    col = edge_index[1].astype(jnp.int32)

    # --- wrapper preprocessing: dense per-destination neighbor layout -------
    # Sort edges by destination and assign each edge a rank within its segment
    # so every edge gets a unique (dst, slot) cell; unused cells are masked.
    order = jnp.argsort(col)
    row_s = row[order]
    col_s = col[order]
    counts = jnp.bincount(col, length=M).astype(jnp.int32)
    seg_start = jnp.cumsum(counts) - counts                         # (M,)
    rank = jnp.arange(E, dtype=jnp.int32) - seg_start[col_s]
    slot = col_s * k_pad + rank                                     # unique / edge

    diff = pos[row_s] - pos_dst[col_s]                              # (E, D)
    dense = jnp.zeros((m_pad * k_pad, D), jnp.float32).at[slot].set(diff)
    dense = jnp.pad(dense, ((0, 0), (0, d_pad - D)))
    diff_dense = dense.reshape(m_pad, k_pad, d_pad)

    valid = jnp.zeros((m_pad * k_pad,), jnp.bool_).at[slot].set(True)
    neg_mask = jnp.where(valid, 0.0, -jnp.inf).astype(jnp.float32)
    neg_mask = neg_mask.reshape(m_pad, k_pad, 1)

    # --- lane-dense, 8/128-aligned parameters --------------------------------
    w_dtype = jnp.bfloat16 if use_bf16 else jnp.float32
    basis_p = jnp.zeros((d_pad, F), w_dtype).at[:D].set(basis.astype(w_dtype))
    wl_p = jnp.zeros((d_pad + 2 * F, h_pad), w_dtype)
    wl_p = wl_p.at[:D, :H].set(wl[:D].astype(w_dtype))
    wl_p = wl_p.at[d_pad:d_pad + 2 * F, :H].set(wl[D:].astype(w_dtype))
    bl_p = jnp.zeros((1, h_pad), jnp.float32).at[:, :H].set(bl.reshape(1, H))
    wg_p = jnp.zeros((h_pad, hout_pad), w_dtype).at[:H, :Hout].set(wg.astype(w_dtype))
    bg_p = jnp.zeros((1, hout_pad), jnp.float32).at[:, :Hout].set(bg.reshape(1, Hout))

    grid = (m_pad // tile_m, k_pad // tile_k)
    const = lambda a: pl.BlockSpec(a.shape, lambda i, k: (0,) * a.ndim)

    out = pl.pallas_call(
        _pointconv_kernel,
        out_shape=jax.ShapeDtypeStruct((m_pad, hout_pad), jnp.float32),
        grid_spec=pltpu.PrefetchScalarGridSpec(
            num_scalar_prefetch=0,
            grid=grid,
            in_specs=[
                pl.BlockSpec((tile_m, tile_k, d_pad), lambda i, k: (i, k, 0)),
                pl.BlockSpec((tile_m, tile_k, 1), lambda i, k: (i, k, 0)),
                const(basis_p), const(wl_p), const(bl_p),
                const(wg_p), const(bg_p),
            ],
            out_specs=pl.BlockSpec((tile_m, hout_pad), lambda i, k: (i, 0)),
            scratch_shapes=[pltpu.VMEM((tile_m, h_pad), jnp.float32)],
        ),
        compiler_params=pltpu.CompilerParams(
            dimension_semantics=("parallel", "arbitrary"),
            vmem_limit_bytes=32 * 1024 * 1024,
        ),
    )(diff_dense, neg_mask, basis_p, wl_p, bl_p, wg_p, bg_p)

    # TODO(synk): destinations with no incoming edges keep the -inf segment-max
    # identity (like jax.ops.segment_max) and turn into inf/NaN after global_nn;
    # clamp here if a torch_scatter-style fill is required.
    return out[:M, :Hout]


def _reference(pos, pos_dst, edge_index, basis, wl, bl, wg, bg, dim_size):
    row, col = edge_index
    out = pos[row] - pos_dst[col]
    emb = out @ basis
    out = jnp.concatenate([out, jnp.sin(emb), jnp.cos(emb)], axis=1)
    out = jnp.maximum(out @ wl + bl, 0.0)              # local_nn: Linear + ReLU
    out = jax.ops.segment_max(out, col, num_segments=dim_size)
    return out @ wg + bg                               # global_nn: Linear


if __name__ == "__main__":
    key = jax.random.PRNGKey(0)
    N, M, D, F, H, Hout, E = 64, 32, 3, 16, 32, 32, 256

    ks = jax.random.split(key, 9)
    pos = jax.random.normal(ks[0], (N, D), jnp.float32)
    pos_dst = jax.random.normal(ks[1], (M, D), jnp.float32)
    row = jax.random.randint(ks[2], (E,), 0, N, dtype=jnp.int32)
    # Every destination covered (no empty segments) + uneven extra degree.
    col = jnp.concatenate([
        jnp.arange(192, dtype=jnp.int32) % M,
        jax.random.randint(ks[3], (E - 192,), 0, M, dtype=jnp.int32),
    ])
    edge_index = jnp.stack([row, col], axis=0)          # (2, E)
    basis = jax.random.normal(ks[4], (D, F), jnp.float32)

    # Deterministic synthetic parameters (local_nn: Linear+ReLU, global_nn: Linear).
    wl = 0.1 * jax.random.normal(ks[5], (D + 2 * F, H), jnp.float32)
    bl = 0.1 * jax.random.normal(ks[6], (H,), jnp.float32)
    wg = 0.1 * jax.random.normal(ks[7], (H, Hout), jnp.float32)
    bg = 0.1 * jax.random.normal(ks[8], (Hout,), jnp.float32)

    dim_size = int(col.max()) + 1                       # torch: col.max().item() + 1
    max_degree = int(jnp.bincount(col, length=dim_size).max())

    out = pointconv(pos, pos_dst, edge_index, basis, wl, bl, wg, bg,
                    dim_size=dim_size, max_degree=max_degree,
                    tile_m=8, tile_k=8, use_bf16=False)
    out = jax.block_until_ready(out)

    ref = _reference(pos, pos_dst, edge_index, basis, wl, bl, wg, bg, dim_size)
    assert out.shape == (dim_size, Hout)
    assert jnp.allclose(out, ref, atol=1e-3, rtol=1e-3), "mismatch vs JAX reference"

    print("KERNEL_OK")
</pallas_src>

<mosaic_0001>
module attributes {stable_mosaic.version = 11 : i64} {
  func.func private @main(%arg0: i32) attributes {dimension_semantics = [#tpu.dimension_semantics<core_parallel>], iteration_bounds = array<i64: 2>, tpu.core_type = #tpu.core_type<sc_scalar_subcore>, window_params = []} {
    return
  }
}

module attributes {stable_mosaic.version = 11 : i64} {
  func.func private @main(%arg0: i32) attributes {dimension_semantics = [#tpu.dimension_semantics<core_parallel>], iteration_bounds = array<i64: 2>, tpu.core_type = #tpu.core_type<sc_scalar_subcore>, window_params = []} {
    return
  }
}

module attributes {stable_mosaic.version = 11 : i64} {
  func.func @_pointconv_kernel(%arg0: i32, %arg1: i32, %arg2: memref<8x8x8xf32, #tpu.memory_space<vmem>>, %arg3: memref<8x8x1xf32, #tpu.memory_space<vmem>>, %arg4: memref<8x16xf32, #tpu.memory_space<vmem>>, %arg5: memref<40x128xf32, #tpu.memory_space<vmem>>, %arg6: memref<1x128xf32, #tpu.memory_space<vmem>>, %arg7: memref<128x128xf32, #tpu.memory_space<vmem>>, %arg8: memref<1x128xf32, #tpu.memory_space<vmem>>, %arg9: memref<8x128xf32, #tpu.memory_space<vmem>>, %arg10: memref<8x128xf32, #tpu.memory_space<vmem>>) attributes {dimension_semantics = [#tpu.dimension_semantics<parallel>, #tpu.dimension_semantics<arbitrary>], iteration_bounds = array<i64: 4, 2>, scalar_prefetch = 0 : i64, scratch_operands = 1 : i64, tpu.core_type = #tpu.core_type<tc>, window_params = [{transform_indices = @transform_0, window_bounds = array<i64: 8, 8, 8>}, {transform_indices = @transform_1, window_bounds = array<i64: 8, 8, 1>}, {pipeline_mode = #tpu.pipeline_mode<synchronous>, transform_indices = @transform_2, window_bounds = array<i64: 8, 16>}, {pipeline_mode = #tpu.pipeline_mode<synchronous>, transform_indices = @transform_3, window_bounds = array<i64: 40, 128>}, {pipeline_mode = #tpu.pipeline_mode<synchronous>, transform_indices = @transform_4, window_bounds = array<i64: 1, 128>}, {pipeline_mode = #tpu.pipeline_mode<synchronous>, transform_indices = @transform_5, window_bounds = array<i64: 128, 128>}, {pipeline_mode = #tpu.pipeline_mode<synchronous>, transform_indices = @transform_6, window_bounds = array<i64: 1, 128>}, {transform_indices = @transform_7, window_bounds = array<i64: 8, 128>}]} {
    %c0_i32 = arith.constant 0 : i32
    %0 = arith.cmpi eq, %arg1, %c0_i32 : i32
    %1 = arith.extui %0 : i1 to i32
    %cst = arith.constant 0xFF800000 : f32
    %c0_i32_0 = arith.constant 0 : i32
    %2 = arith.cmpi ne, %1, %c0_i32_0 : i32
    scf.if %2 {
      %28 = vector.broadcast %cst : f32 to vector<8x128xf32>
      %c0_21 = arith.constant 0 : index
      %c0_22 = arith.constant 0 : index
      %29 = vector.load %arg10[%c0_21, %c0_22] : memref<8x128xf32, #tpu.memory_space<vmem>>, vector<8x128xf32>
      tpu.vector_store %arg10[%c0_21, %c0_22], %28 {strides = array<i32>} : memref<8x128xf32, #tpu.memory_space<vmem>>, vector<8x128xf32>,
    } else {
    }
    %c0 = arith.constant 0 : index
    %c0_1 = arith.constant 0 : index
    %c0_2 = arith.constant 0 : index
    %3 = vector.load %arg2[%c0, %c0_1, %c0_2] : memref<8x8x8xf32, #tpu.memory_space<vmem>>, vector<8x8x8xf32>
    %4 = vector.shape_cast %3 : vector<8x8x8xf32> to vector<64x8xf32>
    %c0_3 = arith.constant 0 : index
    %c0_4 = arith.constant 0 : index
    %5 = vector.load %arg4[%c0_3, %c0_4] : memref<8x16xf32, #tpu.memory_space<vmem>>, vector<8x16xf32>
    %cst_5 = arith.constant dense<0.000000e+00> : vector<64x16xf32>
    %6 = tpu.matmul %4, %5, %cst_5 {dimension_numbers = #tpu.dot_dimension_numbers<[1], [0], [0], [1], [0, 0, 1, 1], [], []>} : vector<64x8xf32>, vector<8x16xf32>, vector<64x16xf32> -> vector<64x16xf32>
    %7 = math.sin %6 : vector<64x16xf32>
    %8 = math.cos %6 : vector<64x16xf32>
    %9 = tpu.concatenate %4, %7, %8 in 1 : vector<64x8xf32>, vector<64x16xf32>, vector<64x16xf32> -> vector<64x40xf32>
    %c0_6 = arith.constant 0 : index
    %c0_7 = arith.constant 0 : index
    %10 = vector.load %arg5[%c0_6, %c0_7] : memref<40x128xf32, #tpu.memory_space<vmem>>, vector<40x128xf32>
    %cst_8 = arith.constant dense<0.000000e+00> : vector<64x128xf32>
    %11 = tpu.matmul %9, %10, %cst_8 {dimension_numbers = #tpu.dot_dimension_numbers<[1], [0], [0], [1], [0, 0, 1, 1], [], []>} : vector<64x40xf32>, vector<40x128xf32>, vector<64x128xf32> -> vector<64x128xf32>
    %c0_9 = arith.constant 0 : index
    %c0_10 = arith.constant 0 : index
    %12 = vector.load %arg6[%c0_9, %c0_10] : memref<1x128xf32, #tpu.memory_space<vmem>>, vector<1x128xf32>
    %13 = vector.broadcast %12 : vector<1x128xf32> to vector<64x128xf32>
    %14 = arith.addf %11, %13 : vector<64x128xf32>
    %cst_11 = arith.constant 0.000000e+00 : f32
    %15 = vector.broadcast %cst_11 : f32 to vector<64x128xf32>
    %16 = arith.maximumf %14, %15 : vector<64x128xf32>
    %17 = vector.shape_cast %16 : vector<64x128xf32> to vector<8x8x128xf32>
    %c0_12 = arith.constant 0 : index
    %c0_13 = arith.constant 0 : index
    %c0_14 = arith.constant 0 : index
    %18 = vector.load %arg3[%c0_12, %c0_13, %c0_14] : memref<8x8x1xf32, #tpu.memory_space<vmem>>, vector<8x8x1xf32>
    %19 = vector.broadcast %18 : vector<8x8x1xf32> to vector<8x8x128xf32>
    %20 = arith.addf %17, %19 : vector<8x8x128xf32>
    %c0_15 = arith.constant 0 : index
    %c0_16 = arith.constant 0 : index
    %21 = vector.load %arg10[%c0_15, %c0_16] : memref<8x128xf32, #tpu.memory_space<vmem>>, vector<8x128xf32>
    %cst_17 = arith.constant dense<0xFF800000> : vector<8x128xf32>
    %22 = vector.multi_reduction <maximumf>, %20, %cst_17 [1] : vector<8x8x128xf32> to vector<8x128xf32>
    %23 = arith.maximumf %21, %22 : vector<8x128xf32>
    %c0_18 = arith.constant 0 : index
    %c0_19 = arith.constant 0 : index
    %24 = vector.load %arg10[%c0_18, %c0_19] : memref<8x128xf32, #tpu.memory_space<vmem>>, vector<8x128xf32>
    tpu.vector_store %arg10[%c0_18, %c0_19], %23 {strides = array<i32>} : memref<8x128xf32, #tpu.memory_space<vmem>>, vector<8x128xf32>,
    %c1_i32 = arith.constant 1 : i32
    %25 = arith.cmpi eq, %arg1, %c1_i32 : i32
    %26 = arith.extui %25 : i1 to i32
    %c0_i32_20 = arith.constant 0 : i32
    %27 = arith.cmpi ne, %26, %c0_i32_20 : i32
    scf.if %27 {
      %c0_21 = arith.constant 0 : index
      %c0_22 = arith.constant 0 : index
      %28 = vector.load %arg10[%c0_21, %c0_22] : memref<8x128xf32, #tpu.memory_space<vmem>>, vector<8x128xf32>
      %c0_23 = arith.constant 0 : index
      %c0_24 = arith.constant 0 : index
      %29 = vector.load %arg7[%c0_23, %c0_24] : memref<128x128xf32, #tpu.memory_space<vmem>>, vector<128x128xf32>
      %cst_25 = arith.constant dense<0.000000e+00> : vector<8x128xf32>
      %30 = tpu.matmul %28, %29, %cst_25 {dimension_numbers = #tpu.dot_dimension_numbers<[1], [0], [0], [1], [0, 0, 1, 1], [], []>} : vector<8x128xf32>, vector<128x128xf32>, vector<8x128xf32> -> vector<8x128xf32>
      %c0_26 = arith.constant 0 : index
      %c0_27 = arith.constant 0 : index
      %31 = vector.load %arg8[%c0_26, %c0_27] : memref<1x128xf32, #tpu.memory_space<vmem>>, vector<1x128xf32>
      %32 = vector.broadcast %31 : vector<1x128xf32> to vector<8x128xf32>
      %33 = arith.addf %30, %32 : vector<8x128xf32>
      %c0_28 = arith.constant 0 : index
      %c0_29 = arith.constant 0 : index
      %34 = vector.load %arg9[%c0_28, %c0_29] : memref<8x128xf32, #tpu.memory_space<vmem>>, vector<8x128xf32>
      tpu.vector_store %arg9[%c0_28, %c0_29], %33 {strides = array<i32>} : memref<8x128xf32, #tpu.memory_space<vmem>>, vector<8x128xf32>,
    } else {
    }
    return
  }
  func.func @transform_0(%arg0: i32, %arg1: i32) -> (i32, i32, i32) {
    %c0_i32 = arith.constant 0 : i32
    %c0_i32_0 = arith.constant 0 : i32
    return %arg0, %arg1, %c0_i32 : i32, i32, i32
  }
  func.func @transform_1(%arg0: i32, %arg1: i32) -> (i32, i32, i32) {
    %c0_i32 = arith.constant 0 : i32
    %c0_i32_0 = arith.constant 0 : i32
    return %arg0, %arg1, %c0_i32 : i32, i32, i32
  }
  func.func @transform_2(%arg0: i32, %arg1: i32) -> (i32, i32) {
    %c0_i32 = arith.constant 0 : i32
    %c0_i32_0 = arith.constant 0 : i32
    %c0_i32_1 = arith.constant 0 : i32
    return %c0_i32, %c0_i32_0 : i32, i32
  }
  func.func @transform_3(%arg0: i32, %arg1: i32) -> (i32, i32) {
    %c0_i32 = arith.constant 0 : i32
    %c0_i32_0 = arith.constant 0 : i32
    %c0_i32_1 = arith.constant 0 : i32
    return %c0_i32, %c0_i32_0 : i32, i32
  }
  func.func @transform_4(%arg0: i32, %arg1: i32) -> (i32, i32) {
    %c0_i32 = arith.constant 0 : i32
    %c0_i32_0 = arith.constant 0 : i32
    %c0_i32_1 = arith.constant 0 : i32
    return %c0_i32, %c0_i32_0 : i32, i32
  }
  func.func @transform_5(%arg0: i32, %arg1: i32) -> (i32, i32) {
    %c0_i32 = arith.constant 0 : i32
    %c0_i32_0 = arith.constant 0 : i32
    %c0_i32_1 = arith.constant 0 : i32
    return %c0_i32, %c0_i32_0 : i32, i32
  }
  func.func @transform_6(%arg0: i32, %arg1: i32) -> (i32, i32) {
    %c0_i32 = arith.constant 0 : i32
    %c0_i32_0 = arith.constant 0 : i32
    %c0_i32_1 = arith.constant 0 : i32
    return %c0_i32, %c0_i32_0 : i32, i32
  }
  func.func @transform_7(%arg0: i32, %arg1: i32) -> (i32, i32) {
    %c0_i32 = arith.constant 0 : i32
    %c0_i32_0 = arith.constant 0 : i32
    return %arg0, %c0_i32 : i32, i32
  }
}

</mosaic_0001>

<llo_original>
// kernel: sub.3
$region0: #{sub.3}
  #allocation0 [shape = 's32[1]{0}', space=sflag, size = 0x4, scoped, tag = 'scoped memory for sub.3']
  %s0 = inlined_call_operand.vmem [shape: s32[32], index: 0, kind: input, shape index: {}]
  %s1 = inlined_call_operand.vmem [shape: s32[32], index: 1, kind: input, shape index: {}]
  %s2 = inlined_call_operand.vmem [shape: s32[32], index: 2, kind: output, shape index: {}]
  %v3 = vld [vmem:[%s0] sm:$0x1]
  %v4 = vld [vmem:[%s1] sm:$0x1]
  %5 = xla_tuple %v3, %v4
  %6 = xla_tuple %5
  %v7 = vsub.s32 %v3, %v4
  %8 = xla_tuple %v7
  %9 = vst [vmem:[%s2] sm:$0x1] %v7

// kernel: pointconv.1
$region0: #{pointconv.1}
  #allocation0 [shape = 'u32[]', space=smem, size = 0x4, offset = 0x4, fixed_abs, tag = 'smem constant byte address 0x4 - core index']
  #allocation1 [shape = 'u32[144,128]{1,0:T(1,128)}', space=vmem, size = 0x12000, scoped, tag = 'internal scratch']
  #allocation2 [shape = 'f32[8,128]{1,0:T(8,128)}', space=vmem, size = 0x1000, scoped, tag = 'scratch operand']
  %s0 = inlined_call_operand.vmem [shape: f32[32,16,8], index: 0, kind: input, shape index: {}]
  %s1 = inlined_call_operand.vmem [shape: f32[32,16,1], index: 1, kind: input, shape index: {}]
  %s2 = inlined_call_operand.vmem [shape: f32[8,16], index: 2, kind: input, shape index: {}]
  %s3 = inlined_call_operand.vmem [shape: f32[40,128], index: 3, kind: input, shape index: {}]
  %s4 = inlined_call_operand.vmem [shape: f32[1,128], index: 4, kind: input, shape index: {}]
  %s5 = inlined_call_operand.vmem [shape: f32[128,128], index: 5, kind: input, shape index: {}]
  %s6 = inlined_call_operand.vmem [shape: f32[1,128], index: 6, kind: input, shape index: {}]
  %s7 = inlined_call_operand.hbm [shape: f32[32,128], index: 7, kind: output, shape index: {}]
  %s8 = sld [smem:[#allocation0]]
  $region145: #{pointconv.1} parent=0
    _
  %s10 = ssub.s32 1, %s8
  %s11 = scalar_select 0, %s10, %s8
  $region1: #{pointconv.1} parent=0
    #allocation3 [shape = 'u8[65536]{0}', space=vmem, size = 0x10000, scoped, tag = 'input window, operand 0']
    #allocation4 [shape = 'u8[65536]{0}', space=vmem, size = 0x10000, scoped, tag = 'input window, operand 1']
    #allocation5 [shape = 'u8[8192]{0}', space=vmem, size = 0x2000, scoped, tag = 'output window, operand 0']
    #allocation6 [shape = 's32[2]{0}', space=sflag, size = 0x8, scoped, tag = 'scoped memory for pointconv.1']
    %12 = vsyncpa [#allocation6], 0
    %s13 = scalar_lea.sflag [#allocation6], 1
    %14 = vsyncpa %s13, 0
    loop: start=0, step=1, limit=10
    $region2: #{pointconv.1} parent=1 // loop_pre_header
      _
    $region3: #{pointconv.1} parent=1 // loop_header
      %s16 = sphi 0, %s20
      %p17 = scmp.ge.s32.totalorder %s16, 10
      %s23 = sphi 0, %s35
      %s24 = sphi 0, %s31
      %s25 = sphi 0, %s23
      %s26 = sphi 0, %s24
      %s27 = sphi 0, %s25
      %s28 = sphi 0, %s26
      %s40 = sphi 0, %s42
      %s43 = sphi 0, %s40
      %s44 = sphi 0, %s43
      %s60 = sphi 0, %s44
      %s68 = sphi 0, %s70
      %s71 = sphi 0, %s68
      %s72 = sphi 0, %s71
      %s88 = sphi 0, %s72
      %s92 = sphi 0, %s92
      %s94 = sphi 0, %s92
      %s95 = sphi 0, %s94
      %s109 = sphi 0, %s95
      %s113 = sphi 0, %s113
      %s115 = sphi 0, %s113
      %s116 = sphi 0, %s115
      %s130 = sphi 0, %s116
      %s134 = sphi 0, %s134
      %s136 = sphi 0, %s134
      %s137 = sphi 0, %s136
      %s151 = sphi 0, %s137
      %s155 = sphi 0, %s155
      %s157 = sphi 0, %s155
      %s158 = sphi 0, %s157
      %s172 = sphi 0, %s158
      %s176 = sphi 0, %s176
      %s178 = sphi 0, %s176
      %s179 = sphi 0, %s178
      %s193 = sphi 0, %s179
      %s199 = sphi 0, %s201
      %s202 = sphi 0, %s199
      %s203 = sphi 0, %s202
      %s219 = sphi 0, %s203
    $region4: #{pointconv.1} parent=1 // loop_header_branch
      %19 = sbr.rel (%p17) target = $region8
    $region5: #{pointconv.1} parent=1 // loop_body
      %s21 = ssub.s32 %s16, 1
      %s22 = ssub.s32 %s16, 2
      %s29 = sadd.s32 1, %s24
      %p30 = scmp.ge.s32.totalorder %s29, 2
      %s31 = scalar_select %p30, 0, %s29
      %s32 = sadd.s32 1, %s23
      %s33 = scalar_select %p30, %s32, %s23
      %p34 = scmp.ge.s32.totalorder %s33, 4
      %s35 = scalar_select %p34, 0, %s33
      %s36 = ssub.s32 %s23, %s35
      %s37 = ssub.s32 %s24, %s31
      %s38 = sor.u32 %s36, %s37
      %p39 = scmp.eq.s32.totalorder %s38, 0
      %s41 = sadd.s32 %s40, 1
      %s42 = scalar_select %p39, %s40, %s41
      %p45 = pneg %p39
      %p46 = scmp.eq.s32.totalorder %s16, 7
      %p47 = por %p45, %p46
      %p48 = scmp.ne.s32.totalorder %s40, %s43
      %p49 = scmp.eq.s32.totalorder %s16, 0
      %p50 = por %p48, %p49
      %p51 = scmp.ne.s32.totalorder %s40, %s43
      %p52 = scmp.eq.s32.totalorder %s21, 7
      %p53 = por %p51, %p52
      %p54 = scmp.ne.s32.totalorder %s43, %s44
      %p55 = scmp.eq.s32.totalorder %s21, 0
      %p56 = por %p54, %p55
      %p57 = scmp.ne.s32.totalorder %s43, %s44
      %p58 = scmp.eq.s32.totalorder %s22, 7
      %p59 = por %p57, %p58
      %p61 = scmp.ne.s32.totalorder %s44, %s60
      %p62 = scmp.eq.s32.totalorder %s22, 0
      %p63 = por %p61, %p62
      %s64 = ssub.s32 %s23, %s35
      %s65 = ssub.s32 %s24, %s31
      %s66 = sor.u32 %s64, %s65
      %p67 = scmp.eq.s32.totalorder %s66, 0
      %s69 = sadd.s32 %s68, 1
      %s70 = scalar_select %p67, %s68, %s69
      %p73 = pneg %p67
      %p74 = scmp.eq.s32.totalorder %s16, 7
      %p75 = por %p73, %p74
      %p76 = scmp.ne.s32.totalorder %s68, %s71
      %p77 = scmp.eq.s32.totalorder %s16, 0
      %p78 = por %p76, %p77
      %p79 = scmp.ne.s32.totalorder %s68, %s71
      %p80 = scmp.eq.s32.totalorder %s21, 7
      %p81 = por %p79, %p80
      %p82 = scmp.ne.s32.totalorder %s71, %s72
      %p83 = scmp.eq.s32.totalorder %s21, 0
      %p84 = por %p82, %p83
      %p85 = scmp.ne.s32.totalorder %s71, %s72
      %p86 = scmp.eq.s32.totalorder %s22, 7
      %p87 = por %p85, %p86
      %p89 = scmp.ne.s32.totalorder %s72, %s88
      %p90 = scmp.eq.s32.totalorder %s22, 0
      %p91 = por %p89, %p90
      %s93 = sadd.s32 %s92, 1
      %p96 = scmp.eq.s32.totalorder %s16, 7
      %p97 = scmp.ne.s32.totalorder %s92, %s94
      %p98 = scmp.eq.s32.totalorder %s16, 0
      %p99 = por %p97, %p98
      %p100 = scmp.ne.s32.totalorder %s92, %s94
      %p101 = scmp.eq.s32.totalorder %s21, 7
      %p102 = por %p100, %p101
      %p103 = scmp.ne.s32.totalorder %s94, %s95
      %p104 = scmp.eq.s32.totalorder %s21, 0
      %p105 = por %p103, %p104
      %p106 = scmp.ne.s32.totalorder %s94, %s95
      %p107 = scmp.eq.s32.totalorder %s22, 7
      %p108 = por %p106, %p107
      %p110 = scmp.ne.s32.totalorder %s95, %s109
      %p111 = scmp.eq.s32.totalorder %s22, 0
      %p112 = por %p110, %p111
      %s114 = sadd.s32 %s113, 1
      %p117 = scmp.eq.s32.totalorder %s16, 7
      %p118 = scmp.ne.s32.totalorder %s113, %s115
      %p119 = scmp.eq.s32.totalorder %s16, 0
      %p120 = por %p118, %p119
      %p121 = scmp.ne.s32.totalorder %s113, %s115
      %p122 = scmp.eq.s32.totalorder %s21, 7
      %p123 = por %p121, %p122
      %p124 = scmp.ne.s32.totalorder %s115, %s116
      %p125 = scmp.eq.s32.totalorder %s21, 0
      %p126 = por %p124, %p125
      %p127 = scmp.ne.s32.totalorder %s115, %s116
      %p128 = scmp.eq.s32.totalorder %s22, 7
      %p129 = por %p127, %p128
      %p131 = scmp.ne.s32.totalorder %s116, %s130
      %p132 = scmp.eq.s32.totalorder %s22, 0
      %p133 = por %p131, %p132
      %s135 = sadd.s32 %s134, 1
      %p138 = scmp.eq.s32.totalorder %s16, 7
      %p139 = scmp.ne.s32.totalorder %s134, %s136
      %p140 = scmp.eq.s32.totalorder %s16, 0
      %p141 = por %p139, %p140
      %p142 = scmp.ne.s32.totalorder %s134, %s136
      %p143 = scmp.eq.s32.totalorder %s21, 7
      %p144 = por %p142, %p143
      %p145 = scmp.ne.s32.totalorder %s136, %s137
      %p146 = scmp.eq.s32.totalorder %s21, 0
      %p147 = por %p145, %p146
      %p148 = scmp.ne.s32.totalorder %s136, %s137
      %p149 = scmp.eq.s32.totalorder %s22, 7
      %p150 = por %p148, %p149
      %p152 = scmp.ne.s32.totalorder %s137, %s151
      %p153 = scmp.eq.s32.totalorder %s22, 0
      %p154 = por %p152, %p153
      %s156 = sadd.s32 %s155, 1
      %p159 = scmp.eq.s32.totalorder %s16, 7
      %p160 = scmp.ne.s32.totalorder %s155, %s157
      %p161 = scmp.eq.s32.totalorder %s16, 0
      %p162 = por %p160, %p161
      %p163 = scmp.ne.s32.totalorder %s155, %s157
      %p164 = scmp.eq.s32.totalorder %s21, 7
      %p165 = por %p163, %p164
      %p166 = scmp.ne.s32.totalorder %s157, %s158
      %p167 = scmp.eq.s32.totalorder %s21, 0
      %p168 = por %p166, %p167
      %p169 = scmp.ne.s32.totalorder %s157, %s158
      %p170 = scmp.eq.s32.totalorder %s22, 7
      %p171 = por %p169, %p170
      %p173 = scmp.ne.s32.totalorder %s158, %s172
      %p174 = scmp.eq.s32.totalorder %s22, 0
      %p175 = por %p173, %p174
      %s177 = sadd.s32 %s176, 1
      %p180 = scmp.eq.s32.totalorder %s16, 7
      %p181 = scmp.ne.s32.totalorder %s176, %s178
      %p182 = scmp.eq.s32.totalorder %s16, 0
      %p183 = por %p181, %p182
      %p184 = scmp.ne.s32.totalorder %s176, %s178
      %p185 = scmp.eq.s32.totalorder %s21, 7
      %p186 = por %p184, %p185
      %p187 = scmp.ne.s32.totalorder %s178, %s179
      %p188 = scmp.eq.s32.totalorder %s21, 0
      %p189 = por %p187, %p188
      %p190 = scmp.ne.s32.totalorder %s178, %s179
      %p191 = scmp.eq.s32.totalorder %s22, 7
      %p192 = por %p190, %p191
      %p194 = scmp.ne.s32.totalorder %s179, %s193
      %p195 = scmp.eq.s32.totalorder %s22, 0
      %p196 = por %p194, %p195
      %s197 = ssub.s32 %s23, %s35
      %p198 = scmp.eq.s32.totalorder %s197, 0
      %s200 = sadd.s32 %s199, 1
      %s201 = scalar_select %p198, %s199, %s200
      %p204 = pneg %p198
      %p205 = scmp.eq.s32.totalorder %s16, 7
      %p206 = por %p204, %p205
      %p207 = scmp.ne.s32.totalorder %s199, %s202
      %p208 = scmp.eq.s32.totalorder %s16, 0
      %p209 = por %p207, %p208
      %p210 = scmp.ne.s32.totalorder %s199, %s202
      %p211 = scmp.eq.s32.totalorder %s21, 7
      %p212 = por %p210, %p211
      %p213 = scmp.ne.s32.totalorder %s202, %s203
      %p214 = scmp.eq.s32.totalorder %s21, 0
      %p215 = por %p213, %p214
      %p216 = scmp.ne.s32.totalorder %s202, %s203
      %p217 = scmp.eq.s32.totalorder %s22, 7
      %p218 = por %p216, %p217
      %p220 = scmp.ne.s32.totalorder %s203, %s219
      %p221 = scmp.eq.s32.totalorder %s22, 0
      %p222 = por %p220, %p221
      %p223 = scmp.le.s32.totalorder 1, %s16
      %p224 = scmp.lt.s32.totalorder %s16, 9
      %p225 = pnand %p223, %p224
      %p226 = pneg %p225
      // Predicated region
      $region9: #{pointconv.1} parent=5 // pred_check
        _
      $region10: #{pointconv.1} parent=5 // pred_check_branch
        %228 = sbr.rel (%p225) target = $region12
      $region11: #{pointconv.1} parent=5 // pred_region
        %s229 = ssub.s32 %s16, 1
        // Predicated region
        $region13: #{pointconv.1} parent=11 // pred_check
          %p230 = pneg %p105
        $region14: #{pointconv.1} parent=11 // pred_check_branch
          %232 = sbr.rel (%p230) target = $region16
        $region15: #{pointconv.1} parent=11 // pred_region
          _
        $region16: #{pointconv.1} parent=11 // pred_fallthru
          _
        // Predicated region
        $region17: #{pointconv.1} parent=11 // pred_check
          %p233 = pneg %p126
        $region18: #{pointconv.1} parent=11 // pred_check_branch
          %235 = sbr.rel (%p233) target = $region20
        $region19: #{pointconv.1} parent=11 // pred_region
          _
        $region20: #{pointconv.1} parent=11 // pred_fallthru
          _
        // Predicated region
        $region21: #{pointconv.1} parent=11 // pred_check
          %p236 = pneg %p147
        $region22: #{pointconv.1} parent=11 // pred_check_branch
          %238 = sbr.rel (%p236) target = $region24
        $region23: #{pointconv.1} parent=11 // pred_region
          _
        $region24: #{pointconv.1} parent=11 // pred_fallthru
          _
        // Predicated region
        $region25: #{pointconv.1} parent=11 // pred_check
          %p239 = pneg %p168
        $region26: #{pointconv.1} parent=11 // pred_check_branch
          %241 = sbr.rel (%p239) target = $region28
        $region27: #{pointconv.1} parent=11 // pred_region
          _
        $region28: #{pointconv.1} parent=11 // pred_fallthru
          _
        // Predicated region
        $region29: #{pointconv.1} parent=11 // pred_check
          %p242 = pneg %p189
        $region30: #{pointconv.1} parent=11 // pred_check_branch
          %244 = sbr.rel (%p242) target = $region32
        $region31: #{pointconv.1} parent=11 // pred_region
          _
        $region32: #{pointconv.1} parent=11 // pred_fallthru
          _
      $region12: #{pointconv.1} parent=5 // pred_fallthru
        _
      %p245 = scmp.lt.s32.totalorder %s16, 8
      // Predicated region
      $region33: #{pointconv.1} parent=5 // pred_check
        %p246 = pneg %p245
      $region34: #{pointconv.1} parent=5 // pred_check_branch
        %248 = sbr.rel (%p246) target = $region36
      $region35: #{pointconv.1} parent=5 // pred_region
        // Predicated region
        $region37: #{pointconv.1} parent=35 // pred_check
          %p249 = pneg %p50
        $region38: #{pointconv.1} parent=35 // pred_check_branch
          %251 = sbr.rel (%p249) target = $region40
        $region39: #{pointconv.1} parent=35 // pred_region
          %s252 = sand.u32 %s40, 1
          %s253 = sand.u32 %s40, 1
          %s254 = smul.addr %s253, 64
          %s255 = scalar_lea.vmem [#allocation3], %s254
          %s256 = smul.u32 8, %s23
          %s257 = smul.addr %s256, 2
          %s258 = sadd.s32 %s24, %s257
          %s259 = smul.addr %s258, 8
          %s260 = scalar_lea.vmem %s0, %s259
          // Predicated region
          $region41: #{pointconv.1} parent=39 // pred_check
            _
          $region42: #{pointconv.1} parent=39 // pred_check_branch
            %262 = sbr.rel (0) target = $region44
          $region43: #{pointconv.1} parent=39 // pred_region
            // Predicated region
            $region45: #{pointconv.1} parent=43 // pred_check
              _
            $region46: #{pointconv.1} parent=43 // pred_check_branch
              %264 = sbr.rel (0) target = $region48
            $region47: #{pointconv.1} parent=43 // pred_region
              // Predicated region
              $region60: #{pointconv.1} parent=47 // pred_check
                _
              $region61: #{pointconv.1} parent=47 // pred_check_branch
                %293 = sbr.rel (0) target = $region63
              $region62: #{pointconv.1} parent=47 // pred_region
                loop: start=0, step=1, limit=1
                $region64: #{pointconv.1} parent=62 // loop_pre_header
                  _
                $region65: #{pointconv.1} parent=62 // loop_header
                  %s295 = sphi 0, %s299
                  %p296 = scmp.ge.s32.totalorder %s295, 1
                  %s300 = sphi %s260, %s260
                  %s301 = sphi %s255, %s255
                $region66: #{pointconv.1} parent=62 // loop_header_branch
                  %298 = sbr.rel (%p296) target = $region70
                $region67: #{pointconv.1} parent=62 // loop_body
                  %v302 = vld [vmem:[%s300] sm:$0xff]
                  %303 = vst [vmem:[%s301] sm:$0xff] %v302
                  %v304 = vld [vmem:[%s300 + $0x10] sm:$0xff]
                  %305 = vst [vmem:[%s301 + $0x8] sm:$0xff] %v304
                  %v306 = vld [vmem:[%s300 + $0x20] sm:$0xff]
                  %307 = vst [vmem:[%s301 + $0x10] sm:$0xff] %v306
                  %v308 = vld [vmem:[%s300 + $0x30] sm:$0xff]
                  %309 = vst [vmem:[%s301 + $0x18] sm:$0xff] %v308
                  %v310 = vld [vmem:[%s300 + $0x40] sm:$0xff]
                  %311 = vst [vmem:[%s301 + $0x20] sm:$0xff] %v310
                  %v312 = vld [vmem:[%s300 + $0x50] sm:$0xff]
                  %313 = vst [vmem:[%s301 + $0x28] sm:$0xff] %v312
                  %v314 = vld [vmem:[%s300 + $0x60] sm:$0xff]
                  %315 = vst [vmem:[%s301 + $0x30] sm:$0xff] %v314
                  %v316 = vld [vmem:[%s300 + $0x70] sm:$0xff]
                  %317 = vst [vmem:[%s301 + $0x38] sm:$0xff] %v316
                $region68: #{pointconv.1} parent=62 // loop_footer
                  %s299 = sadd.s32 1, %s295
                $region69: #{pointconv.1} parent=62 // loop_footer_branch
                  %294 = sbr.rel target = $region65
                $region70: #{pointconv.1} parent=62 // loop_exit
                  _
              $region63: #{pointconv.1} parent=47 // pred_fallthru
                _
              // Predicated region
              $region71: #{pointconv.1} parent=47 // pred_check
                _
              $region72: #{pointconv.1} parent=47 // pred_check_branch
                %319 = sbr.rel target = $region74
              $region73: #{pointconv.1} parent=47 // pred_region
                _
              $region74: #{pointconv.1} parent=47 // pred_fallthru
                _
            $region48: #{pointconv.1} parent=43 // pred_fallthru
              _
            // Predicated region
            $region49: #{pointconv.1} parent=43 // pred_check
              _
            $region50: #{pointconv.1} parent=43 // pred_check_branch
              %266 = sbr.rel target = $region52
            $region51: #{pointconv.1} parent=43 // pred_region
              loop: start=0, step=1, limit=1
              $region53: #{pointconv.1} parent=51 // loop_pre_header
                _
              $region54: #{pointconv.1} parent=51 // loop_header
                %s269 = sphi 0, %s273
                %p270 = scmp.ge.s32.totalorder %s269, 1
                %s274 = sphi %s260, %s260
                %s275 = sphi %s255, %s255
              $region55: #{pointconv.1} parent=51 // loop_header_branch
                %272 = sbr.rel (%p270) target = $region59
              $region56: #{pointconv.1} parent=51 // loop_body
                %v276 = vld [vmem:[%s274] sm:$0xff]
                %277 = vst [vmem:[%s275] sm:$0xff] %v276
                %v278 = vld [vmem:[%s274 + $0x10] sm:$0xff]
                %279 = vst [vmem:[%s275 + $0x8] sm:$0xff] %v278
                %v280 = vld [vmem:[%s274 + $0x20] sm:$0xff]
                %281 = vst [vmem:[%s275 + $0x10] sm:$0xff] %v280
                %v282 = vld [vmem:[%s274 + $0x30] sm:$0xff]
                %283 = vst [vmem:[%s275 + $0x18] sm:$0xff] %v282
                %v284 = vld [vmem:[%s274 + $0x40] sm:$0xff]
                %285 = vst [vmem:[%s275 + $0x20] sm:$0xff] %v284
                %v286 = vld [vmem:[%s274 + $0x50] sm:$0xff]
                %287 = vst [vmem:[%s275 + $0x28] sm:$0xff] %v286
                %v288 = vld [vmem:[%s274 + $0x60] sm:$0xff]
                %289 = vst [vmem:[%s275 + $0x30] sm:$0xff] %v288
                %v290 = vld [vmem:[%s274 + $0x70] sm:$0xff]
                %291 = vst [vmem:[%s275 + $0x38] sm:$0xff] %v290
              $region57: #{pointconv.1} parent=51 // loop_footer
                %s273 = sadd.s32 1, %s269
              $region58: #{pointconv.1} parent=51 // loop_footer_branch
                %268 = sbr.rel target = $region54
              $region59: #{pointconv.1} parent=51 // loop_exit
                _
            $region52: #{pointconv.1} parent=43 // pred_fallthru
              _
          $region44: #{pointconv.1} parent=39 // pred_fallthru
            _
          %320 = vnop
        $region40: #{pointconv.1} parent=35 // pred_fallthru
          _
        // Predicated region
        $region75: #{pointconv.1} parent=35 // pred_check
          %p321 = pneg %p78
        $region76: #{pointconv.1} parent=35 // pred_check_branch
          %323 = sbr.rel (%p321) target = $region78
        $region77: #{pointconv.1} parent=35 // pred_region
          %s324 = sand.u32 %s68, 1
          %s325 = sand.u32 %s68, 1
          %s326 = smul.addr %s325, 64
          %s327 = scalar_lea.vmem [#allocation4], %s326
          %s328 = smul.u32 8, %s23
          %s329 = smul.addr %s328, 2
          %s330 = sadd.s32 %s24, %s329
          %s331 = smul.addr %s330, 8
          %s332 = scalar_lea.vmem %s1, %s331
          // Predicated region
          $region79: #{pointconv.1} parent=77 // pred_check
            _
          $region80: #{pointconv.1} parent=77 // pred_check_branch
            %334 = sbr.rel (0) target = $region82
          $region81: #{pointconv.1} parent=77 // pred_region
            // Predicated region
            $region83: #{pointconv.1} parent=81 // pred_check
              _
            $region84: #{pointconv.1} parent=81 // pred_check_branch
              %336 = sbr.rel (0) target = $region86
            $region85: #{pointconv.1} parent=81 // pred_region
              // Predicated region
              $region98: #{pointconv.1} parent=85 // pred_check
                _
              $region99: #{pointconv.1} parent=85 // pred_check_branch
                %365 = sbr.rel (0) target = $region101
              $region100: #{pointconv.1} parent=85 // pred_region
                loop: start=0, step=1, limit=1
                $region102: #{pointconv.1} parent=100 // loop_pre_header
                  _
                $region103: #{pointconv.1} parent=100 // loop_header
                  %s367 = sphi 0, %s371
                  %p368 = scmp.ge.s32.totalorder %s367, 1
                  %s372 = sphi %s332, %s332
                  %s373 = sphi %s327, %s327
                $region104: #{pointconv.1} parent=100 // loop_header_branch
                  %370 = sbr.rel (%p368) target = $region108
                $region105: #{pointconv.1} parent=100 // loop_body
                  %v374 = vld [vmem:[%s372] sm:$0xff]
                  %375 = vst [vmem:[%s373] sm:$0xff] %v374
                  %v376 = vld [vmem:[%s372 + $0x10] sm:$0xff]
                  %377 = vst [vmem:[%s373 + $0x8] sm:$0xff] %v376
                  %v378 = vld [vmem:[%s372 + $0x20] sm:$0xff]
                  %379 = vst [vmem:[%s373 + $0x10] sm:$0xff] %v378
                  %v380 = vld [vmem:[%s372 + $0x30] sm:$0xff]
                  %381 = vst [vmem:[%s373 + $0x18] sm:$0xff] %v380
                  %v382 = vld [vmem:[%s372 + $0x40] sm:$0xff]
                  %383 = vst [vmem:[%s373 + $0x20] sm:$0xff] %v382
                  %v384 = vld [vmem:[%s372 + $0x50] sm:$0xff]
                  %385 = vst [vmem:[%s373 + $0x28] sm:$0xff] %v384
                  %v386 = vld [vmem:[%s372 + $0x60] sm:$0xff]
                  %387 = vst [vmem:[%s373 + $0x30] sm:$0xff] %v386
                  %v388 = vld [vmem:[%s372 + $0x70] sm:$0xff]
                  %389 = vst [vmem:[%s373 + $0x38] sm:$0xff] %v388
                $region106: #{pointconv.1} parent=100 // loop_footer
                  %s371 = sadd.s32 1, %s367
                $region107: #{pointconv.1} parent=100 // loop_footer_branch
                  %366 = sbr.rel target = $region103
                $region108: #{pointconv.1} parent=100 // loop_exit
                  _
              $region101: #{pointconv.1} parent=85 // pred_fallthru
                _
              // Predicated region
              $region109: #{pointconv.1} parent=85 // pred_check
                _
              $region110: #{pointconv.1} parent=85 // pred_check_branch
                %391 = sbr.rel target = $region112
              $region111: #{pointconv.1} parent=85 // pred_region
                _
              $region112: #{pointconv.1} parent=85 // pred_fallthru
                _
            $region86: #{pointconv.1} parent=81 // pred_fallthru
              _
            // Predicated region
            $region87: #{pointconv.1} parent=81 // pred_check
              _
            $region88: #{pointconv.1} parent=81 // pred_check_branch
              %338 = sbr.rel target = $region90
            $region89: #{pointconv.1} parent=81 // pred_region
              loop: start=0, step=1, limit=1
              $region91: #{pointconv.1} parent=89 // loop_pre_header
                _
              $region92: #{pointconv.1} parent=89 // loop_header
                %s341 = sphi 0, %s345
                %p342 = scmp.ge.s32.totalorder %s341, 1
                %s346 = sphi %s332, %s332
                %s347 = sphi %s327, %s327
              $region93: #{pointconv.1} parent=89 // loop_header_branch
                %344 = sbr.rel (%p342) target = $region97
              $region94: #{pointconv.1} parent=89 // loop_body
                %v348 = vld [vmem:[%s346] sm:$0xff]
                %349 = vst [vmem:[%s347] sm:$0xff] %v348
                %v350 = vld [vmem:[%s346 + $0x10] sm:$0xff]
                %351 = vst [vmem:[%s347 + $0x8] sm:$0xff] %v350
                %v352 = vld [vmem:[%s346 + $0x20] sm:$0xff]
                %353 = vst [vmem:[%s347 + $0x10] sm:$0xff] %v352
                %v354 = vld [vmem:[%s346 + $0x30] sm:$0xff]
                %355 = vst [vmem:[%s347 + $0x18] sm:$0xff] %v354
                %v356 = vld [vmem:[%s346 + $0x40] sm:$0xff]
                %357 = vst [vmem:[%s347 + $0x20] sm:$0xff] %v356
                %v358 = vld [vmem:[%s346 + $0x50] sm:$0xff]
                %359 = vst [vmem:[%s347 + $0x28] sm:$0xff] %v358
                %v360 = vld [vmem:[%s346 + $0x60] sm:$0xff]
                %361 = vst [vmem:[%s347 + $0x30] sm:$0xff] %v360
                %v362 = vld [vmem:[%s346 + $0x70] sm:$0xff]
                %363 = vst [vmem:[%s347 + $0x38] sm:$0xff] %v362
              $region95: #{pointconv.1} parent=89 // loop_footer
                %s345 = sadd.s32 1, %s341
              $region96: #{pointconv.1} parent=89 // loop_footer_branch
                %340 = sbr.rel target = $region92
              $region97: #{pointconv.1} parent=89 // loop_exit
                _
            $region90: #{pointconv.1} parent=81 // pred_fallthru
              _
          $region82: #{pointconv.1} parent=77 // pred_fallthru
            _
          %392 = vnop
        $region78: #{pointconv.1} parent=35 // pred_fallthru
          _
      $region36: #{pointconv.1} parent=5 // pred_fallthru
        _
      %p393 = scmp.le.s32.totalorder 1, %s16
      %p394 = scmp.lt.s32.totalorder %s16, 9
      %p395 = pnand %p393, %p394
      %p396 = pneg %p395
      // Predicated region
      $region113: #{pointconv.1} parent=5 // pred_check
        _
      $region114: #{pointconv.1} parent=5 // pred_check_branch
        %398 = sbr.rel (%p395) target = $region116
      $region115: #{pointconv.1} parent=5 // pred_region
        %s399 = ssub.s32 %s16, 1
        %s400 = sand.u32 %s43, 1
        %s401 = sand.u32 %s43, 1
        %s402 = smul.addr %s401, 64
        %s403 = scalar_lea.vmem [#allocation3], %s402
        // Predicated region
        $region117: #{pointconv.1} parent=115 // pred_check
          %p404 = pneg %p56
        $region118: #{pointconv.1} parent=115 // pred_check_branch
          %406 = sbr.rel (%p404) target = $region120
        $region119: #{pointconv.1} parent=115 // pred_region
          _
        $region120: #{pointconv.1} parent=115 // pred_fallthru
          _
        %s407 = sand.u32 %s71, 1
        %s408 = sand.u32 %s71, 1
        %s409 = smul.addr %s408, 64
        %s410 = scalar_lea.vmem [#allocation4], %s409
        // Predicated region
        $region121: #{pointconv.1} parent=115 // pred_check
          %p411 = pneg %p84
        $region122: #{pointconv.1} parent=115 // pred_check_branch
          %413 = sbr.rel (%p411) target = $region124
        $region123: #{pointconv.1} parent=115 // pred_region
          _
        $region124: #{pointconv.1} parent=115 // pred_fallthru
          _
        %s414 = sand.u32 %s43, 1
        %s415 = sand.u32 %s43, 1
        %s416 = smul.addr %s415, 64
        %s417 = scalar_lea.vmem [#allocation3], %s416
        %p418 = pneg %p56
        %p419 = pneg %p53
        %s420 = sand.u32 %s71, 1
        %s421 = sand.u32 %s71, 1
        %s422 = smul.addr %s421, 64
        %s423 = scalar_lea.vmem [#allocation4], %s422
        %p424 = pneg %p84
        %p425 = pneg %p81
        %p426 = pneg %p105
        %p427 = pneg %p102
        %p428 = pneg %p126
        %p429 = pneg %p123
        %p430 = pneg %p147
        %p431 = pneg %p144
        %p432 = pneg %p168
        %p433 = pneg %p165
        %p434 = pneg %p189
        %p435 = pneg %p186
        %p436 = pneg %p215
        %p437 = pneg %p212
        %s438 = sand.u32 %s202, 1
        %s439 = scalar_lea.sflag [#allocation6], %s438
        %s440 = sand.u32 %s202, 1
        %s441 = smul.addr %s440, 8
        %s442 = scalar_lea.vmem [#allocation5], %s441
        %s443 = smul.u32 8, %s25
        %s444 = smul.u32 8, %s25
        %p445 = scmp.eq.s32.totalorder %s26, 0
        // Predicated region
        $region125: #{pointconv.1} parent=115 // pred_check
          %p446 = pneg %p445
        $region126: #{pointconv.1} parent=115 // pred_check_branch
          %448 = sbr.rel (%p446) target = $region128
        $region127: #{pointconv.1} parent=115 // pred_region
          %449 = vst [vmem:[#allocation2] sm:$0xff] -inf
        $region128: #{pointconv.1} parent=115 // pred_fallthru
          _
        %v450 = vld [vmem:[%s403] sm:$0xff]
        %v451 = vld [vmem:[%s403 + $0x8] sm:$0xff]
        %v452 = vld [vmem:[%s403 + $0x10] sm:$0xff]
        %v453 = vld [vmem:[%s403 + $0x18] sm:$0xff]
        %v454 = vld [vmem:[%s403 + $0x20] sm:$0xff]
        %v455 = vld [vmem:[%s403 + $0x28] sm:$0xff]
        %v456 = vld [vmem:[%s403 + $0x30] sm:$0xff]
        %v457 = vld [vmem:[%s403 + $0x38] sm:$0xff]
        %v458 = vld [vmem:[%s2] sm:$0xff]
        %vm459 = vcmask 64512
        %v461 = vsel %vm459, %v450, 0
        %v464 = vsel %vm459, %v451, 0
        %v467 = vsel %vm459, %v452, 0
        %v470 = vsel %vm459, %v453, 0
        %v473 = vsel %vm459, %v454, 0
        %v476 = vsel %vm459, %v455, 0
        %v479 = vsel %vm459, %v456, 0
        %v482 = vsel %vm459, %v457, 0
        %484 = vmatprep.subr.mxu0 0.0
        %485 = vmatpush1.msra.mxu0 %v458
        %486 = vmatprep.subr.mxu0 0.0
        %487 = vmatpush1.msra.mxu0 0.0
        %488 = vmatprep.subr.mxu0 0.0
        %489 = vmatpush1.msra.mxu0 0.0
        %490 = vmatprep.subr.mxu0 0.0
        %491 = vmatpush1.msra.mxu0 0.0
        %492 = vmatprep.subr.mxu0 0.0
        %493 = vmatpush1.msra.mxu0 0.0
        %494 = vmatprep.subr.mxu0 0.0
        %495 = vmatpush1.msra.mxu0 0.0
        %496 = vmatprep.subr.mxu0 0.0
        %497 = vmatpush1.msra.mxu0 0.0
        %498 = vmatprep.subr.mxu0 0.0
        %499 = vmatpush1.msra.mxu0 0.0
        %500 = vmatprep.subr.mxu0 0.0
        %501 = vmatpush1.msra.mxu0 0.0
        %502 = vmatprep.subr.mxu0 0.0
        %503 = vmatpush1.msra.mxu0 0.0
        %504 = vmatprep.subr.mxu0 0.0
        %505 = vmatpush1.msra.mxu0 0.0
        %506 = vmatprep.subr.mxu0 0.0
        %507 = vmatpush1.msra.mxu0 0.0
        %508 = vmatprep.subr.mxu0 0.0
        %509 = vmatpush1.msra.mxu0 0.0
        %510 = vmatprep.subr.mxu0 0.0
        %511 = vmatpush1.msra.mxu0 0.0
        %512 = vmatprep.subr.mxu0 0.0
        %513 = vmatpush1.msra.mxu0 0.0
        %514 = vmatprep.subr.mxu0 0.0
        %515 = vmatpush1.msra.mxu0 0.0
        %516 = vmatprep.subr.mxu0 0.0
        %517 = vmatpush1.msra.mxu0 0.0
        %518 = vmatprep.subr.mxu0 0.0
        %519 = vmatpush1.msra.mxu0 0.0
        %520 = vmatprep.subr.mxu0 0.0
        %521 = vmatpush1.msra.mxu0 0.0
        %522 = vmatprep.subr.mxu0 0.0
        %523 = vmatpush1.msra.mxu0 0.0
        %524 = vmatprep.subr.mxu0 0.0
        %525 = vmatpush1.msra.mxu0 0.0
        %526 = vmatprep.subr.mxu0 0.0
        %527 = vmatpush1.msra.mxu0 0.0
        %528 = vmatprep.subr.mxu0 0.0
        %529 = vmatpush1.msra.mxu0 0.0
        %530 = vmatprep.subr.mxu0 0.0
        %531 = vmatpush1.msra.mxu0 0.0
        %532 = vmatprep.subr.mxu0 0.0
        %533 = vmatpush1.msra.mxu0 0.0
        %534 = vmatprep.subr.mxu0 0.0
        %535 = vmatpush1.msra.mxu0 0.0
        %536 = vmatprep.subr.mxu0 0.0
        %537 = vmatpush1.msra.mxu0 0.0
        %538 = vmatprep.subr.mxu0 0.0
        %539 = vmatpush1.msra.mxu0 0.0
        %540 = vmatprep.subr.mxu0 0.0
        %541 = vmatpush1.msra.mxu0 0.0
        %542 = vmatprep.subr.mxu0 0.0
        %543 = vmatpush1.msra.mxu0 0.0
        %544 = vmatprep.subr.mxu0 0.0
        %545 = vmatpush1.msra.mxu0 0.0
        %546 = vmatprep.subr.mxu0 0.0
        %547 = vmatpush1.msra.mxu0 0.0
        %548 = vmatprep.mubr.f32.mxu0 0.0
        %549 = vmatmul.mubr.f32.gmra.mrb[0].mxu0 %v461
        %v550 = vpop.f32.mrb[0].mxu0
        %v551 = vadd.f32 0.0, %v550
        %v552 = vpop.f32.mrb[0].mxu0
        %553 = vmatprep.mubr.f32.mxu0 0.0
        %554 = vmatmul.mubr.f32.gmra.mrb[0].mxu0 %v464
        %v555 = vpop.f32.mrb[0].mxu0
        %v556 = vadd.f32 0.0, %v555
        %v557 = vpop.f32.mrb[0].mxu0
        %558 = vmatprep.mubr.f32.mxu0 0.0
        %559 = vmatmul.mubr.f32.gmra.mrb[0].mxu0 %v467
        %v560 = vpop.f32.mrb[0].mxu0
        %v561 = vadd.f32 0.0, %v560
        %v562 = vpop.f32.mrb[0].mxu0
        %563 = vmatprep.mubr.f32.mxu0 0.0
        %564 = vmatmul.mubr.f32.gmra.mrb[0].mxu0 %v470
        %v565 = vpop.f32.mrb[0].mxu0
        %v566 = vadd.f32 0.0, %v565
        %v567 = vpop.f32.mrb[0].mxu0
        %568 = vmatprep.mubr.f32.mxu0 0.0
        %569 = vmatmul.mubr.f32.gmra.mrb[0].mxu0 %v473
        %v570 = vpop.f32.mrb[0].mxu0
        %v571 = vadd.f32 0.0, %v570
        %v572 = vpop.f32.mrb[0].mxu0
        %573 = vmatprep.mubr.f32.mxu0 0.0
        %574 = vmatmul.mubr.f32.gmra.mrb[0].mxu0 %v476
        %v575 = vpop.f32.mrb[0].mxu0
        %v576 = vadd.f32 0.0, %v575
        %v577 = vpop.f32.mrb[0].mxu0
        %578 = vmatprep.mubr.f32.mxu0 0.0
        %579 = vmatmul.mubr.f32.gmra.mrb[0].mxu0 %v479
        %v580 = vpop.f32.mrb[0].mxu0
        %v581 = vadd.f32 0.0, %v580
        %v582 = vpop.f32.mrb[0].mxu0
        %583 = vmatprep.mubr.f32.mxu0 0.0
        %584 = vmatmul.mubr.f32.gmra.mrb[0].mxu0 %v482
        %v585 = vpop.f32.mrb[0].mxu0
        %v586 = vadd.f32 0.0, %v585
        %v587 = vpop.f32.mrb[0].mxu0
        %588 = vdwg.mxu0
        %v589 = vand.u32 2147483647, %v551
        %vm590 = vcmp.le.f32.partialorder %v589, 0.7853982
        %vm591 = vcmp.lt.s32.totalorder %v551, 0
        %v592 = vand.u32 %v551, 2139095040
        %v593 = vshrl.u32 %v592, 23
        %v594 = vsub.s32 %v593, 127
        %v595 = vand.u32 2147483647, %v551
        %v596 = vand.u32 %v595, 8388607
        %v597 = vor.u32 %v596, 8388608
        %v598 = vsub.s32 0, %v597
        %v599 = vadd.s32 %v594, 1
        %vm600 = vcmp.gt.s32.totalorder %v599, 0
        %v601 = vsel %vm600, %v599, 0
        %v602 = vshrl.u32 %v601, 5
        %v603 = vand.u32 %v601, 31
        %v604 = vsub.s32 32, %v603
        %v605 = vshrl.u32 683565275, %v604
        %v606 = vshll.u32 683565275, %v603
        %v607 = vshrl.u32 2475754826, %v604
        %v608 = vor.u32 %v606, %v607
        %v609 = vshll.u32 2475754826, %v603
        %v610 = vshrl.u32 2131351028, %v604
        %v611 = vor.u32 %v609, %v610
        %v612 = vshll.u32 2131351028, %v603
        %v613 = vshrl.u32 2102212464, %v604
        %v614 = vor.u32 %v612, %v613
        %v615 = vshll.u32 2102212464, %v603
        %v616 = vshrl.u32 920167782, %v604
        %v617 = vor.u32 %v615, %v616
        %v618 = vshll.u32 920167782, %v603
        %v619 = vshrl.u32 1326507024, %v604
        %v620 = vor.u32 %v618, %v619
        %vm621 = vcmp.lt.s32.totalorder %v602, 1
        %vm622 = vcmp.lt.s32.totalorder %v602, 2
        %vm623 = vcmp.lt.s32.totalorder %v602, 3
        %vm624 = vcmp.lt.s32.totalorder %v602, 4
        %v625 = vsel %vm621, %v605, %v608
        %v626 = vsel %vm624, %v614, 2102212464
        %v627 = vsel %vm623, %v611, %v626
        %v628 = vsel %vm622, %v625, %v627
        %v629 = vsel %vm621, %v608, %v611
        %v630 = vsel %vm624, %v617, 920167782
        %v631 = vsel %vm623, %v614, %v630
        %v632 = vsel %vm622, %v629, %v631
        %v633 = vsel %vm621, %v611, %v614
        %v634 = vsel %vm624, %v620, 1326507024
        %v635 = vsel %vm623, %v617, %v634
        %v636 = vsel %vm622, %v633, %v635
        %v637 = vshll.u32 %v597, 8
        %v638 = vmul.u32.u64.compose %v637, %v636
        %v639 = vextract.low.u32 %v638
        %v640 = vextract.high.u32 %v638
        %v641 = vmul.u32.u64.compose %v637, %v632
        %v642 = vextract.low.u32 %v641
        %v643 = vextract.high.u32 %v641
        %v644 = vmul.u32 %v637, %v628
        %v645 = vadd.s32 %v640, %v642
        %vm646 = vc.u32 %v640, %v642
        %v647 = vadd.s32 %v643, 1
        %v648 = vsel %vm646, %v647, %v643
        %v649 = vadd.s32 %v644, %v648
        %v650 = vadd.s32 %v649, 536870912
        %v651 = vshrl.u32 %v650, 30
        %v652 = vshll.u32 %v651, 30
        %v653 = vsub.s32 %v649, %v652
        %vm654 = vcmp.lt.s32.totalorder %v653, 0
        %v655 = vsub.s32 0, %v653
        %v656 = vsel %vm654, %v655, %v653
        %v657 = vclz %v656
        %v658 = vsub.s32 %v657, 2
        %vm659 = vcmp.gt.s32.totalorder 0, %v658
        %v660 = vsel %vm659, 0, %v658
        %v661 = vsub.s32 32, %v660
        %v662 = vshll.u32 %v653, %v660
        %v663 = vshrl.u32 %v645, %v661
        %v664 = vor.u32 %v662, %v663
        %v665 = vsub.s32 4294967266, %v660
        %v666 = vadd.s32 %v665, 127
        %v667 = vshll.u32 %v666, 23
        %v668 = vor.u32 4788187, %v667
        %v669 = vand.u32 2147483647, %v668
        %v671 = vcvt.s32.f32 %v664
        %v672 = vmul.f32 %v671, %v669
        %v673 = vxor.u32 %v672, 2147483648
        %v674 = vsel %vm591, %v673, %v672
        %v675 = vsub.s32 4, %v651
        %v676 = vsel %vm591, %v675, %v651
        %v677 = vsel %vm590, %v551, %v674
        %v678 = vsel %vm590, 0, %v676
        %v679 = vcosq.f32.pop %v677
        %v680 = vsinq.f32.pop %v677
        %vm681 = vweird.f32 %v551
        %v682 = vadd.s32 %v678, 3
        %v683 = vand.u32 %v682, 3
        %vm684 = vcmp.lt.s32.totalorder %v683, 2
        %vm685 = vcmp.eq.s32.totalorder %v683, 0
        %v686 = vxor.u32 %v680, 2147483648
        %v687 = vsel %vm685, %v679, %v686
        %vm688 = vcmp.eq.s32.totalorder %v683, 2
        %v689 = vxor.u32 %v679, 2147483648
        %v690 = vsel %vm688, %v689, %v680
        %v691 = vsel %vm684, %v687, %v690
        %v692 = vsel %vm681, nan, %v691
        %v693 = vand.u32 2147483647, %v556
        %vm694 = vcmp.le.f32.partialorder %v693, 0.7853982
        %vm695 = vcmp.lt.s32.totalorder %v556, 0
        %v696 = vand.u32 %v556, 2139095040
        %v697 = vshrl.u32 %v696, 23
        %v698 = vsub.s32 %v697, 127
        %v699 = vand.u32 2147483647, %v556
        %v700 = vand.u32 %v699, 8388607
        %v701 = vor.u32 %v700, 8388608
        %v702 = vsub.s32 0, %v701
        %v703 = vadd.s32 %v698, 1
        %vm704 = vcmp.gt.s32.totalorder %v703, 0
        %v705 = vsel %vm704, %v703, 0
        %v706 = vshrl.u32 %v705, 5
        %v707 = vand.u32 %v705, 31
        %v708 = vsub.s32 32, %v707
        %v709 = vshrl.u32 683565275, %v708
        %v710 = vshll.u32 683565275, %v707
        %v711 = vshrl.u32 2475754826, %v708
        %v712 = vor.u32 %v710, %v711
        %v713 = vshll.u32 2475754826, %v707
        %v714 = vshrl.u32 2131351028, %v708
        %v715 = vor.u32 %v713, %v714
        %v716 = vshll.u32 2131351028, %v707
        %v717 = vshrl.u32 2102212464, %v708
        %v718 = vor.u32 %v716, %v717
        %v719 = vshll.u32 2102212464, %v707
        %v720 = vshrl.u32 920167782, %v708
        %v721 = vor.u32 %v719, %v720
        %v722 = vshll.u32 920167782, %v707
        %v723 = vshrl.u32 1326507024, %v708
        %v724 = vor.u32 %v722, %v723
        %vm725 = vcmp.lt.s32.totalorder %v706, 1
        %vm726 = vcmp.lt.s32.totalorder %v706, 2
        %vm727 = vcmp.lt.s32.totalorder %v706, 3
        %vm728 = vcmp.lt.s32.totalorder %v706, 4
        %v729 = vsel %vm725, %v709, %v712
        %v730 = vsel %vm728, %v718, 2102212464
        %v731 = vsel %vm727, %v715, %v730
        %v732 = vsel %vm726, %v729, %v731
        %v733 = vsel %vm725, %v712, %v715
        %v734 = vsel %vm728, %v721, 920167782
        %v735 = vsel %vm727, %v718, %v734
        %v736 = vsel %vm726, %v733, %v735
        %v737 = vsel %vm725, %v715, %v718
        %v738 = vsel %vm728, %v724, 1326507024
        %v739 = vsel %vm727, %v721, %v738
        %v740 = vsel %vm726, %v737, %v739
        %v741 = vshll.u32 %v701, 8
        %v742 = vmul.u32.u64.compose %v741, %v740
        %v743 = vextract.low.u32 %v742
        %v744 = vextract.high.u32 %v742
        %v745 = vmul.u32.u64.compose %v741, %v736
        %v746 = vextract.low.u32 %v745
        %v747 = vextract.high.u32 %v745
        %v748 = vmul.u32 %v741, %v732
        %v749 = vadd.s32 %v744, %v746
        %vm750 = vc.u32 %v744, %v746
        %v751 = vadd.s32 %v747, 1
        %v752 = vsel %vm750, %v751, %v747
        %v753 = vadd.s32 %v748, %v752
        %v754 = vadd.s32 %v753, 536870912
        %v755 = vshrl.u32 %v754, 30
        %v756 = vshll.u32 %v755, 30
        %v757 = vsub.s32 %v753, %v756
        %vm758 = vcmp.lt.s32.totalorder %v757, 0
        %v759 = vsub.s32 0, %v757
        %v760 = vsel %vm758, %v759, %v757
        %v761 = vclz %v760
        %v762 = vsub.s32 %v761, 2
        %vm763 = vcmp.gt.s32.totalorder 0, %v762
        %v764 = vsel %vm763, 0, %v762
        %v765 = vsub.s32 32, %v764
        %v766 = vshll.u32 %v757, %v764
        %v767 = vshrl.u32 %v749, %v765
        %v768 = vor.u32 %v766, %v767
        %v769 = vsub.s32 4294967266, %v764
        %v770 = vadd.s32 %v769, 127
        %v771 = vshll.u32 %v770, 23
        %v772 = vor.u32 4788187, %v771
        %v773 = vand.u32 2147483647, %v772
        %v775 = vcvt.s32.f32 %v768
        %v776 = vmul.f32 %v775, %v773
        %v777 = vxor.u32 %v776, 2147483648
        %v778 = vsel %vm695, %v777, %v776
        %v779 = vsub.s32 4, %v755
        %v780 = vsel %vm695, %v779, %v755
        %v781 = vsel %vm694, %v556, %v778
        %v782 = vsel %vm694, 0, %v780
        %v783 = vcosq.f32.pop %v781
        %v784 = vsinq.f32.pop %v781
        %vm785 = vweird.f32 %v556
        %v786 = vadd.s32 %v782, 3
        %v787 = vand.u32 %v786, 3
        %vm788 = vcmp.lt.s32.totalorder %v787, 2
        %vm789 = vcmp.eq.s32.totalorder %v787, 0
        %v790 = vxor.u32 %v784, 2147483648
        %v791 = vsel %vm789, %v783, %v790
        %vm792 = vcmp.eq.s32.totalorder %v787, 2
        %v793 = vxor.u32 %v783, 2147483648
        %v794 = vsel %vm792, %v793, %v784
        %v795 = vsel %vm788, %v791, %v794
        %v796 = vsel %vm785, nan, %v795
        %v797 = vand.u32 2147483647, %v561
        %vm798 = vcmp.le.f32.partialorder %v797, 0.7853982
        %vm799 = vcmp.lt.s32.totalorder %v561, 0
        %v800 = vand.u32 %v561, 2139095040
        %v801 = vshrl.u32 %v800, 23
        %v802 = vsub.s32 %v801, 127
        %v803 = vand.u32 2147483647, %v561
        %v804 = vand.u32 %v803, 8388607
        %v805 = vor.u32 %v804, 8388608
        %v806 = vsub.s32 0, %v805
        %v807 = vadd.s32 %v802, 1
        %vm808 = vcmp.gt.s32.totalorder %v807, 0
        %v809 = vsel %vm808, %v807, 0
        %v810 = vshrl.u32 %v809, 5
        %v811 = vand.u32 %v809, 31
        %v812 = vsub.s32 32, %v811
        %v813 = vshrl.u32 683565275, %v812
        %v814 = vshll.u32 683565275, %v811
        %v815 = vshrl.u32 2475754826, %v812
        %v816 = vor.u32 %v814, %v815
        %v817 = vshll.u32 2475754826, %v811
        %v818 = vshrl.u32 2131351028, %v812
        %v819 = vor.u32 %v817, %v818
        %v820 = vshll.u32 2131351028, %v811
        %v821 = vshrl.u32 2102212464, %v812
        %v822 = vor.u32 %v820, %v821
        %v823 = vshll.u32 2102212464, %v811
        %v824 = vshrl.u32 920167782, %v812
        %v825 = vor.u32 %v823, %v824
        %v826 = vshll.u32 920167782, %v811
        %v827 = vshrl.u32 1326507024, %v812
        %v828 = vor.u32 %v826, %v827
        %vm829 = vcmp.lt.s32.totalorder %v810, 1
        %vm830 = vcmp.lt.s32.totalorder %v810, 2
        %vm831 = vcmp.lt.s32.totalorder %v810, 3
        %vm832 = vcmp.lt.s32.totalorder %v810, 4
        %v833 = vsel %vm829, %v813, %v816
        %v834 = vsel %vm832, %v822, 2102212464
        %v835 = vsel %vm831, %v819, %v834
        %v836 = vsel %vm830, %v833, %v835
        %v837 = vsel %vm829, %v816, %v819
        %v838 = vsel %vm832, %v825, 920167782
        %v839 = vsel %vm831, %v822, %v838
        %v840 = vsel %vm830, %v837, %v839
        %v841 = vsel %vm829, %v819, %v822
        %v842 = vsel %vm832, %v828, 1326507024
        %v843 = vsel %vm831, %v825, %v842
        %v844 = vsel %vm830, %v841, %v843
        %v845 = vshll.u32 %v805, 8
        %v846 = vmul.u32.u64.compose %v845, %v844
        %v847 = vextract.low.u32 %v846
        %v848 = vextract.high.u32 %v846
        %v849 = vmul.u32.u64.compose %v845, %v840
        %v850 = vextract.low.u32 %v849
        %v851 = vextract.high.u32 %v849
        %v852 = vmul.u32 %v845, %v836
        %v853 = vadd.s32 %v848, %v850
        %vm854 = vc.u32 %v848, %v850
        %v855 = vadd.s32 %v851, 1
        %v856 = vsel %vm854, %v855, %v851
        %v857 = vadd.s32 %v852, %v856
        %v858 = vadd.s32 %v857, 536870912
        %v859 = vshrl.u32 %v858, 30
        %v860 = vshll.u32 %v859, 30
        %v861 = vsub.s32 %v857, %v860
        %vm862 = vcmp.lt.s32.totalorder %v861, 0
        %v863 = vsub.s32 0, %v861
        %v864 = vsel %vm862, %v863, %v861
        %v865 = vclz %v864
        %v866 = vsub.s32 %v865, 2
        %vm867 = vcmp.gt.s32.totalorder 0, %v866
        %v868 = vsel %vm867, 0, %v866
        %v869 = vsub.s32 32, %v868
        %v870 = vshll.u32 %v861, %v868
        %v871 = vshrl.u32 %v853, %v869
        %v872 = vor.u32 %v870, %v871
        %v873 = vsub.s32 4294967266, %v868
        %v874 = vadd.s32 %v873, 127
        %v875 = vshll.u32 %v874, 23
        %v876 = vor.u32 4788187, %v875
        %v877 = vand.u32 2147483647, %v876
        %v879 = vcvt.s32.f32 %v872
        %v880 = vmul.f32 %v879, %v877
        %v881 = vxor.u32 %v880, 2147483648
        %v882 = vsel %vm799, %v881, %v880
        %v883 = vsub.s32 4, %v859
        %v884 = vsel %vm799, %v883, %v859
        %v885 = vsel %vm798, %v561, %v882
        %v886 = vsel %vm798, 0, %v884
        %v887 = vcosq.f32.pop %v885
        %v888 = vsinq.f32.pop %v885
        %vm889 = vweird.f32 %v561
        %v890 = vadd.s32 %v886, 3
        %v891 = vand.u32 %v890, 3
        %vm892 = vcmp.lt.s32.totalorder %v891, 2
        %vm893 = vcmp.eq.s32.totalorder %v891, 0
        %v894 = vxor.u32 %v888, 2147483648
        %v895 = vsel %vm893, %v887, %v894
        %vm896 = vcmp.eq.s32.totalorder %v891, 2
        %v897 = vxor.u32 %v887, 2147483648
        %v898 = vsel %vm896, %v897, %v888
        %v899 = vsel %vm892, %v895, %v898
        %v900 = vsel %vm889, nan, %v899
        %v901 = vand.u32 2147483647, %v566
        %vm902 = vcmp.le.f32.partialorder %v901, 0.7853982
        %vm903 = vcmp.lt.s32.totalorder %v566, 0
        %v904 = vand.u32 %v566, 2139095040
        %v905 = vshrl.u32 %v904, 23
        %v906 = vsub.s32 %v905, 127
        %v907 = vand.u32 2147483647, %v566
        %v908 = vand.u32 %v907, 8388607
        %v909 = vor.u32 %v908, 8388608
        %v910 = vsub.s32 0, %v909
        %v911 = vadd.s32 %v906, 1
        %vm912 = vcmp.gt.s32.totalorder %v911, 0
        %v913 = vsel %vm912, %v911, 0
        %v914 = vshrl.u32 %v913, 5
        %v915 = vand.u32 %v913, 31
        %v916 = vsub.s32 32, %v915
        %v917 = vshrl.u32 683565275, %v916
        %v918 = vshll.u32 683565275, %v915
        %v919 = vshrl.u32 2475754826, %v916
        %v920 = vor.u32 %v918, %v919
        %v921 = vshll.u32 2475754826, %v915
        %v922 = vshrl.u32 2131351028, %v916
        %v923 = vor.u32 %v921, %v922
        %v924 = vshll.u32 2131351028, %v915
        %v925 = vshrl.u32 2102212464, %v916
        %v926 = vor.u32 %v924, %v925
        %v927 = vshll.u32 2102212464, %v915
        %v928 = vshrl.u32 920167782, %v916
        %v929 = vor.u32 %v927, %v928
        %v930 = vshll.u32 920167782, %v915
        %v931 = vshrl.u32 1326507024, %v916
        %v932 = vor.u32 %v930, %v931
        %vm933 = vcmp.lt.s32.totalorder %v914, 1
        %vm934 = vcmp.lt.s32.totalorder %v914, 2
        %vm935 = vcmp.lt.s32.totalorder %v914, 3
        %vm936 = vcmp.lt.s32.totalorder %v914, 4
        %v937 = vsel %vm933, %v917, %v920
        %v938 = vsel %vm936, %v926, 2102212464
        %v939 = vsel %vm935, %v923, %v938
        %v940 = vsel %vm934, %v937, %v939
        %v941 = vsel %vm933, %v920, %v923
        %v942 = vsel %vm936, %v929, 920167782
        %v943 = vsel %vm935, %v926, %v942
        %v944 = vsel %vm934, %v941, %v943
        %v945 = vsel %vm933, %v923, %v926
        %v946 = vsel %vm936, %v932, 1326507024
        %v947 = vsel %vm935, %v929, %v946
        %v948 = vsel %vm934, %v945, %v947
        %v949 = vshll.u32 %v909, 8
        %v950 = vmul.u32.u64.compose %v949, %v948
        %v951 = vextract.low.u32 %v950
        %v952 = vextract.high.u32 %v950
        %v953 = vmul.u32.u64.compose %v949, %v944
        %v954 = vextract.low.u32 %v953
        %v955 = vextract.high.u32 %v953
        %v956 = vmul.u32 %v949, %v940
        %v957 = vadd.s32 %v952, %v954
        %vm958 = vc.u32 %v952, %v954
        %v959 = vadd.s32 %v955, 1
        %v960 = vsel %vm958, %v959, %v955
        %v961 = vadd.s32 %v956, %v960
        %v962 = vadd.s32 %v961, 536870912
        %v963 = vshrl.u32 %v962, 30
        %v964 = vshll.u32 %v963, 30
        %v965 = vsub.s32 %v961, %v964
        %vm966 = vcmp.lt.s32.totalorder %v965, 0
        %v967 = vsub.s32 0, %v965
        %v968 = vsel %vm966, %v967, %v965
        %v969 = vclz %v968
        %v970 = vsub.s32 %v969, 2
        %vm971 = vcmp.gt.s32.totalorder 0, %v970
        %v972 = vsel %vm971, 0, %v970
        %v973 = vsub.s32 32, %v972
        %v974 = vshll.u32 %v965, %v972
        %v975 = vshrl.u32 %v957, %v973
        %v976 = vor.u32 %v974, %v975
        %v977 = vsub.s32 4294967266, %v972
        %v978 = vadd.s32 %v977, 127
        %v979 = vshll.u32 %v978, 23
        %v980 = vor.u32 4788187, %v979
        %v981 = vand.u32 2147483647, %v980
        %v983 = vcvt.s32.f32 %v976
        %v984 = vmul.f32 %v983, %v981
        %v985 = vxor.u32 %v984, 2147483648
        %v986 = vsel %vm903, %v985, %v984
        %v987 = vsub.s32 4, %v963
        %v988 = vsel %vm903, %v987, %v963
        %v989 = vsel %vm902, %v566, %v986
        %v990 = vsel %vm902, 0, %v988
        %v991 = vcosq.f32.pop %v989
        %v992 = vsinq.f32.pop %v989
        %vm993 = vweird.f32 %v566
        %v994 = vadd.s32 %v990, 3
        %v995 = vand.u32 %v994, 3
        %vm996 = vcmp.lt.s32.totalorder %v995, 2
        %vm997 = vcmp.eq.s32.totalorder %v995, 0
        %v998 = vxor.u32 %v992, 2147483648
        %v999 = vsel %vm997, %v991, %v998
        %vm1000 = vcmp.eq.s32.totalorder %v995, 2
        %v1001 = vxor.u32 %v991, 2147483648
        %v1002 = vsel %vm1000, %v1001, %v992
        %v1003 = vsel %vm996, %v999, %v1002
        %v1004 = vsel %vm993, nan, %v1003
        %v1005 = vand.u32 2147483647, %v571
        %vm1006 = vcmp.le.f32.partialorder %v1005, 0.7853982
        %vm1007 = vcmp.lt.s32.totalorder %v571, 0
        %v1008 = vand.u32 %v571, 2139095040
        %v1009 = vshrl.u32 %v1008, 23
        %v1010 = vsub.s32 %v1009, 127
        %v1011 = vand.u32 2147483647, %v571
        %v1012 = vand.u32 %v1011, 8388607
        %v1013 = vor.u32 %v1012, 8388608
        %v1014 = vsub.s32 0, %v1013
        %v1015 = vadd.s32 %v1010, 1
        %vm1016 = vcmp.gt.s32.totalorder %v1015, 0
        %v1017 = vsel %vm1016, %v1015, 0
        %v1018 = vshrl.u32 %v1017, 5
        %v1019 = vand.u32 %v1017, 31
        %v1020 = vsub.s32 32, %v1019
        %v1021 = vshrl.u32 683565275, %v1020
        %v1022 = vshll.u32 683565275, %v1019
        %v1023 = vshrl.u32 2475754826, %v1020
        %v1024 = vor.u32 %v1022, %v1023
        %v1025 = vshll.u32 2475754826, %v1019
        %v1026 = vshrl.u32 2131351028, %v1020
        %v1027 = vor.u32 %v1025, %v1026
        %v1028 = vshll.u32 2131351028, %v1019
        %v1029 = vshrl.u32 2102212464, %v1020
        %v1030 = vor.u32 %v1028, %v1029
        %v1031 = vshll.u32 2102212464, %v1019
        %v1032 = vshrl.u32 920167782, %v1020
        %v1033 = vor.u32 %v1031, %v1032
        %v1034 = vshll.u32 920167782, %v1019
        %v1035 = vshrl.u32 1326507024, %v1020
        %v1036 = vor.u32 %v1034, %v1035
        %vm1037 = vcmp.lt.s32.totalorder %v1018, 1
        %vm1038 = vcmp.lt.s32.totalorder %v1018, 2
        %vm1039 = vcmp.lt.s32.totalorder %v1018, 3
        %vm1040 = vcmp.lt.s32.totalorder %v1018, 4
        %v1041 = vsel %vm1037, %v1021, %v1024
        %v1042 = vsel %vm1040, %v1030, 2102212464
        %v1043 = vsel %vm1039, %v1027, %v1042
        %v1044 = vsel %vm1038, %v1041, %v1043
        %v1045 = vsel %vm1037, %v1024, %v1027
        %v1046 = vsel %vm1040, %v1033, 920167782
        %v1047 = vsel %vm1039, %v1030, %v1046
        %v1048 = vsel %vm1038, %v1045, %v1047
        %v1049 = vsel %vm1037, %v1027, %v1030
        %v1050 = vsel %vm1040, %v1036, 1326507024
        %v1051 = vsel %vm1039, %v1033, %v1050
        %v1052 = vsel %vm1038, %v1049, %v1051
        %v1053 = vshll.u32 %v1013, 8
        %v1054 = vmul.u32.u64.compose %v1053, %v1052
        %v1055 = vextract.low.u32 %v1054
        %v1056 = vextract.high.u32 %v1054
        %v1057 = vmul.u32.u64.compose %v1053, %v1048
        %v1058 = vextract.low.u32 %v1057
        %v1059 = vextract.high.u32 %v1057
        %v1060 = vmul.u32 %v1053, %v1044
        %v1061 = vadd.s32 %v1056, %v1058
        %vm1062 = vc.u32 %v1056, %v1058
        %v1063 = vadd.s32 %v1059, 1
        %v1064 = vsel %vm1062, %v1063, %v1059
        %v1065 = vadd.s32 %v1060, %v1064
        %v1066 = vadd.s32 %v1065, 536870912
        %v1067 = vshrl.u32 %v1066, 30
        %v1068 = vshll.u32 %v1067, 30
        %v1069 = vsub.s32 %v1065, %v1068
        %vm1070 = vcmp.lt.s32.totalorder %v1069, 0
        %v1071 = vsub.s32 0, %v1069
        %v1072 = vsel %vm1070, %v1071, %v1069
        %v1073 = vclz %v1072
        %v1074 = vsub.s32 %v1073, 2
        %vm1075 = vcmp.gt.s32.totalorder 0, %v1074
        %v1076 = vsel %vm1075, 0, %v1074
        %v1077 = vsub.s32 32, %v1076
        %v1078 = vshll.u32 %v1069, %v1076
        %v1079 = vshrl.u32 %v1061, %v1077
        %v1080 = vor.u32 %v1078, %v1079
        %v1081 = vsub.s32 4294967266, %v1076
        %v1082 = vadd.s32 %v1081, 127
        %v1083 = vshll.u32 %v1082, 23
        %v1084 = vor.u32 4788187, %v1083
        %v1085 = vand.u32 2147483647, %v1084
        %v1087 = vcvt.s32.f32 %v1080
        %v1088 = vmul.f32 %v1087, %v1085
        %v1089 = vxor.u32 %v1088, 2147483648
        %v1090 = vsel %vm1007, %v1089, %v1088
        %v1091 = vsub.s32 4, %v1067
        %v1092 = vsel %vm1007, %v1091, %v1067
        %v1093 = vsel %vm1006, %v571, %v1090
        %v1094 = vsel %vm1006, 0, %v1092
        %v1095 = vcosq.f32.pop %v1093
        %v1096 = vsinq.f32.pop %v1093
        %vm1097 = vweird.f32 %v571
        %v1098 = vadd.s32 %v1094, 3
        %v1099 = vand.u32 %v1098, 3
        %vm1100 = vcmp.lt.s32.totalorder %v1099, 2
        %vm1101 = vcmp.eq.s32.totalorder %v1099, 0
        %v1102 = vxor.u32 %v1096, 2147483648
        %v1103 = vsel %vm1101, %v1095, %v1102
        %vm1104 = vcmp.eq.s32.totalorder %v1099, 2
        %v1105 = vxor.u32 %v1095, 2147483648
        %v1106 = vsel %vm1104, %v1105, %v1096
        %v1107 = vsel %vm1100, %v1103, %v1106
        %v1108 = vsel %vm1097, nan, %v1107
        %v1109 = vand.u32 2147483647, %v576
        %vm1110 = vcmp.le.f32.partialorder %v1109, 0.7853982
        %vm1111 = vcmp.lt.s32.totalorder %v576, 0
        %v1112 = vand.u32 %v576, 2139095040
        %v1113 = vshrl.u32 %v1112, 23
        %v1114 = vsub.s32 %v1113, 127
        %v1115 = vand.u32 2147483647, %v576
        %v1116 = vand.u32 %v1115, 8388607
        %v1117 = vor.u32 %v1116, 8388608
        %v1118 = vsub.s32 0, %v1117
        %v1119 = vadd.s32 %v1114, 1
        %vm1120 = vcmp.gt.s32.totalorder %v1119, 0
        %v1121 = vsel %vm1120, %v1119, 0
        %v1122 = vshrl.u32 %v1121, 5
        %v1123 = vand.u32 %v1121, 31
        %v1124 = vsub.s32 32, %v1123
        %v1125 = vshrl.u32 683565275, %v1124
        %v1126 = vshll.u32 683565275, %v1123
        %v1127 = vshrl.u32 2475754826, %v1124
        %v1128 = vor.u32 %v1126, %v1127
        %v1129 = vshll.u32 2475754826, %v1123
        %v1130 = vshrl.u32 2131351028, %v1124
        %v1131 = vor.u32 %v1129, %v1130
        %v1132 = vshll.u32 2131351028, %v1123
        %v1133 = vshrl.u32 2102212464, %v1124
        %v1134 = vor.u32 %v1132, %v1133
        %v1135 = vshll.u32 2102212464, %v1123
        %v1136 = vshrl.u32 920167782, %v1124
        %v1137 = vor.u32 %v1135, %v1136
        %v1138 = vshll.u32 920167782, %v1123
        %v1139 = vshrl.u32 1326507024, %v1124
        %v1140 = vor.u32 %v1138, %v1139
        %vm1141 = vcmp.lt.s32.totalorder %v1122, 1
        %vm1142 = vcmp.lt.s32.totalorder %v1122, 2
        %vm1143 = vcmp.lt.s32.totalorder %v1122, 3
        %vm1144 = vcmp.lt.s32.totalorder %v1122, 4
        %v1145 = vsel %vm1141, %v1125, %v1128
        %v1146 = vsel %vm1144, %v1134, 2102212464
        %v1147 = vsel %vm1143, %v1131, %v1146
        %v1148 = vsel %vm1142, %v1145, %v1147
        %v1149 = vsel %vm1141, %v1128, %v1131
        %v1150 = vsel %vm1144, %v1137, 920167782
        %v1151 = vsel %vm1143, %v1134, %v1150
        %v1152 = vsel %vm1142, %v1149, %v1151
        %v1153 = vsel %vm1141, %v1131, %v1134
        %v1154 = vsel %vm1144, %v1140, 1326507024
        %v1155 = vsel %vm1143, %v1137, %v1154
        %v1156 = vsel %vm1142, %v1153, %v1155
        %v1157 = vshll.u32 %v1117, 8
        %v1158 = vmul.u32.u64.compose %v1157, %v1156
        %v1159 = vextract.low.u32 %v1158
        %v1160 = vextract.high.u32 %v1158
        %v1161 = vmul.u32.u64.compose %v1157, %v1152
        %v1162 = vextract.low.u32 %v1161
        %v1163 = vextract.high.u32 %v1161
        %v1164 = vmul.u32 %v1157, %v1148
        %v1165 = vadd.s32 %v1160, %v1162
        %vm1166 = vc.u32 %v1160, %v1162
        %v1167 = vadd.s32 %v1163, 1
        %v1168 = vsel %vm1166, %v1167, %v1163
        %v1169 = vadd.s32 %v1164, %v1168
        %v1170 = vadd.s32 %v1169, 536870912
        %v1171 = vshrl.u32 %v1170, 30
        %v1172 = vshll.u32 %v1171, 30
        %v1173 = vsub.s32 %v1169, %v1172
        %vm1174 = vcmp.lt.s32.totalorder %v1173, 0
        %v1175 = vsub.s32 0, %v1173
        %v1176 = vsel %vm1174, %v1175, %v1173
        %v1177 = vclz %v1176
        %v1178 = vsub.s32 %v1177, 2
        %vm1179 = vcmp.gt.s32.totalorder 0, %v1178
        %v1180 = vsel %vm1179, 0, %v1178
        %v1181 = vsub.s32 32, %v1180
        %v1182 = vshll.u32 %v1173, %v1180
        %v1183 = vshrl.u32 %v1165, %v1181
        %v1184 = vor.u32 %v1182, %v1183
        %v1185 = vsub.s32 4294967266, %v1180
        %v1186 = vadd.s32 %v1185, 127
        %v1187 = vshll.u32 %v1186, 23
        %v1188 = vor.u32 4788187, %v1187
        %v1189 = vand.u32 2147483647, %v1188
        %v1191 = vcvt.s32.f32 %v1184
        %v1192 = vmul.f32 %v1191, %v1189
        %v1193 = vxor.u32 %v1192, 2147483648
        %v1194 = vsel %vm1111, %v1193, %v1192
        %v1195 = vsub.s32 4, %v1171
        %v1196 = vsel %vm1111, %v1195, %v1171
        %v1197 = vsel %vm1110, %v576, %v1194
        %v1198 = vsel %vm1110, 0, %v1196
        %v1199 = vcosq.f32.pop %v1197
        %v1200 = vsinq.f32.pop %v1197
        %vm1201 = vweird.f32 %v576
        %v1202 = vadd.s32 %v1198, 3
        %v1203 = vand.u32 %v1202, 3
        %vm1204 = vcmp.lt.s32.totalorder %v1203, 2
        %vm1205 = vcmp.eq.s32.totalorder %v1203, 0
        %v1206 = vxor.u32 %v1200, 2147483648
        %v1207 = vsel %vm1205, %v1199, %v1206
        %vm1208 = vcmp.eq.s32.totalorder %v1203, 2
        %v1209 = vxor.u32 %v1199, 2147483648
        %v1210 = vsel %vm1208, %v1209, %v1200
        %v1211 = vsel %vm1204, %v1207, %v1210
        %v1212 = vsel %vm1201, nan, %v1211
        %v1213 = vand.u32 2147483647, %v581
        %vm1214 = vcmp.le.f32.partialorder %v1213, 0.7853982
        %vm1215 = vcmp.lt.s32.totalorder %v581, 0
        %v1216 = vand.u32 %v581, 2139095040
        %v1217 = vshrl.u32 %v1216, 23
        %v1218 = vsub.s32 %v1217, 127
        %v1219 = vand.u32 2147483647, %v581
        %v1220 = vand.u32 %v1219, 8388607
        %v1221 = vor.u32 %v1220, 8388608
        %v1222 = vsub.s32 0, %v1221
        %v1223 = vadd.s32 %v1218, 1
        %vm1224 = vcmp.gt.s32.totalorder %v1223, 0
        %v1225 = vsel %vm1224, %v1223, 0
        %v1226 = vshrl.u32 %v1225, 5
        %v1227 = vand.u32 %v1225, 31
        %v1228 = vsub.s32 32, %v1227
        %v1229 = vshrl.u32 683565275, %v1228
        %v1230 = vshll.u32 683565275, %v1227
        %v1231 = vshrl.u32 2475754826, %v1228
        %v1232 = vor.u32 %v1230, %v1231
        %v1233 = vshll.u32 2475754826, %v1227
        %v1234 = vshrl.u32 2131351028, %v1228
        %v1235 = vor.u32 %v1233, %v1234
        %v1236 = vshll.u32 2131351028, %v1227
        %v1237 = vshrl.u32 2102212464, %v1228
        %v1238 = vor.u32 %v1236, %v1237
        %v1239 = vshll.u32 2102212464, %v1227
        %v1240 = vshrl.u32 920167782, %v1228
        %v1241 = vor.u32 %v1239, %v1240
        %v1242 = vshll.u32 920167782, %v1227
        %v1243 = vshrl.u32 1326507024, %v1228
        %v1244 = vor.u32 %v1242, %v1243
        %vm1245 = vcmp.lt.s32.totalorder %v1226, 1
        %vm1246 = vcmp.lt.s32.totalorder %v1226, 2
        %vm1247 = vcmp.lt.s32.totalorder %v1226, 3
        %vm1248 = vcmp.lt.s32.totalorder %v1226, 4
        %v1249 = vsel %vm1245, %v1229, %v1232
        %v1250 = vsel %vm1248, %v1238, 2102212464
        %v1251 = vsel %vm1247, %v1235, %v1250
        %v1252 = vsel %vm1246, %v1249, %v1251
        %v1253 = vsel %vm1245, %v1232, %v1235
        %v1254 = vsel %vm1248, %v1241, 920167782
        %v1255 = vsel %vm1247, %v1238, %v1254
        %v1256 = vsel %vm1246, %v1253, %v1255
        %v1257 = vsel %vm1245, %v1235, %v1238
        %v1258 = vsel %vm1248, %v1244, 1326507024
        %v1259 = vsel %vm1247, %v1241, %v1258
        %v1260 = vsel %vm1246, %v1257, %v1259
        %v1261 = vshll.u32 %v1221, 8
        %v1262 = vmul.u32.u64.compose %v1261, %v1260
        %v1263 = vextract.low.u32 %v1262
        %v1264 = vextract.high.u32 %v1262
        %v1265 = vmul.u32.u64.compose %v1261, %v1256
        %v1266 = vextract.low.u32 %v1265
        %v1267 = vextract.high.u32 %v1265
        %v1268 = vmul.u32 %v1261, %v1252
        %v1269 = vadd.s32 %v1264, %v1266
        %vm1270 = vc.u32 %v1264, %v1266
        %v1271 = vadd.s32 %v1267, 1
        %v1272 = vsel %vm1270, %v1271, %v1267
        %v1273 = vadd.s32 %v1268, %v1272
        %v1274 = vadd.s32 %v1273, 536870912
        %v1275 = vshrl.u32 %v1274, 30
        %v1276 = vshll.u32 %v1275, 30
        %v1277 = vsub.s32 %v1273, %v1276
        %vm1278 = vcmp.lt.s32.totalorder %v1277, 0
        %v1279 = vsub.s32 0, %v1277
        %v1280 = vsel %vm1278, %v1279, %v1277
        %v1281 = vclz %v1280
        %v1282 = vsub.s32 %v1281, 2
        %vm1283 = vcmp.gt.s32.totalorder 0, %v1282
        %v1284 = vsel %vm1283, 0, %v1282
        %v1285 = vsub.s32 32, %v1284
        %v1286 = vshll.u32 %v1277, %v1284
        %v1287 = vshrl.u32 %v1269, %v1285
        %v1288 = vor.u32 %v1286, %v1287
        %v1289 = vsub.s32 4294967266, %v1284
        %v1290 = vadd.s32 %v1289, 127
        %v1291 = vshll.u32 %v1290, 23
        %v1292 = vor.u32 4788187, %v1291
        %v1293 = vand.u32 2147483647, %v1292
        %v1295 = vcvt.s32.f32 %v1288
        %v1296 = vmul.f32 %v1295, %v1293
        %v1297 = vxor.u32 %v1296, 2147483648
        %v1298 = vsel %vm1215, %v1297, %v1296
        %v1299 = vsub.s32 4, %v1275
        %v1300 = vsel %vm1215, %v1299, %v1275
        %v1301 = vsel %vm1214, %v581, %v1298
        %v1302 = vsel %vm1214, 0, %v1300
        %v1303 = vcosq.f32.pop %v1301
        %v1304 = vsinq.f32.pop %v1301
        %vm1305 = vweird.f32 %v581
        %v1306 = vadd.s32 %v1302, 3
        %v1307 = vand.u32 %v1306, 3
        %vm1308 = vcmp.lt.s32.totalorder %v1307, 2
        %vm1309 = vcmp.eq.s32.totalorder %v1307, 0
        %v1310 = vxor.u32 %v1304, 2147483648
        %v1311 = vsel %vm1309, %v1303, %v1310
        %vm1312 = vcmp.eq.s32.totalorder %v1307, 2
        %v1313 = vxor.u32 %v1303, 2147483648
        %v1314 = vsel %vm1312, %v1313, %v1304
        %v1315 = vsel %vm1308, %v1311, %v1314
        %v1316 = vsel %vm1305, nan, %v1315
        %v1317 = vand.u32 2147483647, %v586
        %vm1318 = vcmp.le.f32.partialorder %v1317, 0.7853982
        %vm1319 = vcmp.lt.s32.totalorder %v586, 0
        %v1320 = vand.u32 %v586, 2139095040
        %v1321 = vshrl.u32 %v1320, 23
        %v1322 = vsub.s32 %v1321, 127
        %v1323 = vand.u32 2147483647, %v586
        %v1324 = vand.u32 %v1323, 8388607
        %v1325 = vor.u32 %v1324, 8388608
        %v1326 = vsub.s32 0, %v1325
        %v1327 = vadd.s32 %v1322, 1
        %vm1328 = vcmp.gt.s32.totalorder %v1327, 0
        %v1329 = vsel %vm1328, %v1327, 0
        %v1330 = vshrl.u32 %v1329, 5
        %v1331 = vand.u32 %v1329, 31
        %v1332 = vsub.s32 32, %v1331
        %v1333 = vshrl.u32 683565275, %v1332
        %v1334 = vshll.u32 683565275, %v1331
        %v1335 = vshrl.u32 2475754826, %v1332
        %v1336 = vor.u32 %v1334, %v1335
        %v1337 = vshll.u32 2475754826, %v1331
        %v1338 = vshrl.u32 2131351028, %v1332
        %v1339 = vor.u32 %v1337, %v1338
        %v1340 = vshll.u32 2131351028, %v1331
        %v1341 = vshrl.u32 2102212464, %v1332
        %v1342 = vor.u32 %v1340, %v1341
        %v1343 = vshll.u32 2102212464, %v1331
        %v1344 = vshrl.u32 920167782, %v1332
        %v1345 = vor.u32 %v1343, %v1344
        %v1346 = vshll.u32 920167782, %v1331
        %v1347 = vshrl.u32 1326507024, %v1332
        %v1348 = vor.u32 %v1346, %v1347
        %vm1349 = vcmp.lt.s32.totalorder %v1330, 1
        %vm1350 = vcmp.lt.s32.totalorder %v1330, 2
        %vm1351 = vcmp.lt.s32.totalorder %v1330, 3
        %vm1352 = vcmp.lt.s32.totalorder %v1330, 4
        %v1353 = vsel %vm1349, %v1333, %v1336
        %v1354 = vsel %vm1352, %v1342, 2102212464
        %v1355 = vsel %vm1351, %v1339, %v1354
        %v1356 = vsel %vm1350, %v1353, %v1355
        %v1357 = vsel %vm1349, %v1336, %v1339
        %v1358 = vsel %vm1352, %v1345, 920167782
        %v1359 = vsel %vm1351, %v1342, %v1358
        %v1360 = vsel %vm1350, %v1357, %v1359
        %v1361 = vsel %vm1349, %v1339, %v1342
        %v1362 = vsel %vm1352, %v1348, 1326507024
        %v1363 = vsel %vm1351, %v1345, %v1362
        %v1364 = vsel %vm1350, %v1361, %v1363
        %v1365 = vshll.u32 %v1325, 8
        %v1366 = vmul.u32.u64.compose %v1365, %v1364
        %v1367 = vextract.low.u32 %v1366
        %v1368 = vextract.high.u32 %v1366
        %v1369 = vmul.u32.u64.compose %v1365, %v1360
        %v1370 = vextract.low.u32 %v1369
        %v1371 = vextract.high.u32 %v1369
        %v1372 = vmul.u32 %v1365, %v1356
        %v1373 = vadd.s32 %v1368, %v1370
        %vm1374 = vc.u32 %v1368, %v1370
        %v1375 = vadd.s32 %v1371, 1
        %v1376 = vsel %vm1374, %v1375, %v1371
        %v1377 = vadd.s32 %v1372, %v1376
        %v1378 = vadd.s32 %v1377, 536870912
        %v1379 = vshrl.u32 %v1378, 30
        %v1380 = vshll.u32 %v1379, 30
        %v1381 = vsub.s32 %v1377, %v1380
        %vm1382 = vcmp.lt.s32.totalorder %v1381, 0
        %v1383 = vsub.s32 0, %v1381
        %v1384 = vsel %vm1382, %v1383, %v1381
        %v1385 = vclz %v1384
        %v1386 = vsub.s32 %v1385, 2
        %vm1387 = vcmp.gt.s32.totalorder 0, %v1386
        %v1388 = vsel %vm1387, 0, %v1386
        %v1389 = vsub.s32 32, %v1388
        %v1390 = vshll.u32 %v1381, %v1388
        %v1391 = vshrl.u32 %v1373, %v1389
        %v1392 = vor.u32 %v1390, %v1391
        %v1393 = vsub.s32 4294967266, %v1388
        %v1394 = vadd.s32 %v1393, 127
        %v1395 = vshll.u32 %v1394, 23
        %v1396 = vor.u32 4788187, %v1395
        %v1397 = vand.u32 2147483647, %v1396
        %v1399 = vcvt.s32.f32 %v1392
        %v1400 = vmul.f32 %v1399, %v1397
        %v1401 = vxor.u32 %v1400, 2147483648
        %v1402 = vsel %vm1319, %v1401, %v1400
        %v1403 = vsub.s32 4, %v1379
        %v1404 = vsel %vm1319, %v1403, %v1379
        %v1405 = vsel %vm1318, %v586, %v1402
        %v1406 = vsel %vm1318, 0, %v1404
        %v1407 = vcosq.f32.pop %v1405
        %v1408 = vsinq.f32.pop %v1405
        %vm1409 = vweird.f32 %v586
        %v1410 = vadd.s32 %v1406, 3
        %v1411 = vand.u32 %v1410, 3
        %vm1412 = vcmp.lt.s32.totalorder %v1411, 2
        %vm1413 = vcmp.eq.s32.totalorder %v1411, 0
        %v1414 = vxor.u32 %v1408, 2147483648
        %v1415 = vsel %vm1413, %v1407, %v1414
        %vm1416 = vcmp.eq.s32.totalorder %v1411, 2
        %v1417 = vxor.u32 %v1407, 2147483648
        %v1418 = vsel %vm1416, %v1417, %v1408
        %v1419 = vsel %vm1412, %v1415, %v1418
        %v1420 = vsel %vm1409, nan, %v1419
        %v1421 = vand.u32 2147483647, %v551
        %vm1422 = vcmp.le.f32.partialorder %v1421, 0.7853982
        %vm1423 = vcmp.lt.s32.totalorder %v551, 0
        %v1424 = vand.u32 %v551, 2139095040
        %v1425 = vshrl.u32 %v1424, 23
        %v1426 = vsub.s32 %v1425, 127
        %v1427 = vand.u32 2147483647, %v551
        %v1428 = vand.u32 %v1427, 8388607
        %v1429 = vor.u32 %v1428, 8388608
        %v1430 = vsub.s32 0, %v1429
        %v1431 = vadd.s32 %v1426, 1
        %vm1432 = vcmp.gt.s32.totalorder %v1431, 0
        %v1433 = vsel %vm1432, %v1431, 0
        %v1434 = vshrl.u32 %v1433, 5
        %v1435 = vand.u32 %v1433, 31
        %v1436 = vsub.s32 32, %v1435
        %v1437 = vshrl.u32 683565275, %v1436
        %v1438 = vshll.u32 683565275, %v1435
        %v1439 = vshrl.u32 2475754826, %v1436
        %v1440 = vor.u32 %v1438, %v1439
        %v1441 = vshll.u32 2475754826, %v1435
        %v1442 = vshrl.u32 2131351028, %v1436
        %v1443 = vor.u32 %v1441, %v1442
        %v1444 = vshll.u32 2131351028, %v1435
        %v1445 = vshrl.u32 2102212464, %v1436
        %v1446 = vor.u32 %v1444, %v1445
        %v1447 = vshll.u32 2102212464, %v1435
        %v1448 = vshrl.u32 920167782, %v1436
        %v1449 = vor.u32 %v1447, %v1448
        %v1450 = vshll.u32 920167782, %v1435
        %v1451 = vshrl.u32 1326507024, %v1436
        %v1452 = vor.u32 %v1450, %v1451
        %vm1453 = vcmp.lt.s32.totalorder %v1434, 1
        %vm1454 = vcmp.lt.s32.totalorder %v1434, 2
        %vm1455 = vcmp.lt.s32.totalorder %v1434, 3
        %vm1456 = vcmp.lt.s32.totalorder %v1434, 4
        %v1457 = vsel %vm1453, %v1437, %v1440
        %v1458 = vsel %vm1456, %v1446, 2102212464
        %v1459 = vsel %vm1455, %v1443, %v1458
        %v1460 = vsel %vm1454, %v1457, %v1459
        %v1461 = vsel %vm1453, %v1440, %v1443
        %v1462 = vsel %vm1456, %v1449, 920167782
        %v1463 = vsel %vm1455, %v1446, %v1462
        %v1464 = vsel %vm1454, %v1461, %v1463
        %v1465 = vsel %vm1453, %v1443, %v1446
        %v1466 = vsel %vm1456, %v1452, 1326507024
        %v1467 = vsel %vm1455, %v1449, %v1466
        %v1468 = vsel %vm1454, %v1465, %v1467
        %v1469 = vshll.u32 %v1429, 8
        %v1470 = vmul.u32.u64.compose %v1469, %v1468
        %v1471 = vextract.low.u32 %v1470
        %v1472 = vextract.high.u32 %v1470
        %v1473 = vmul.u32.u64.compose %v1469, %v1464
        %v1474 = vextract.low.u32 %v1473
        %v1475 = vextract.high.u32 %v1473
        %v1476 = vmul.u32 %v1469, %v1460
        %v1477 = vadd.s32 %v1472, %v1474
        %vm1478 = vc.u32 %v1472, %v1474
        %v1479 = vadd.s32 %v1475, 1
        %v1480 = vsel %vm1478, %v1479, %v1475
        %v1481 = vadd.s32 %v1476, %v1480
        %v1482 = vadd.s32 %v1481, 536870912
        %v1483 = vshrl.u32 %v1482, 30
        %v1484 = vshll.u32 %v1483, 30
        %v1485 = vsub.s32 %v1481, %v1484
        %vm1486 = vcmp.lt.s32.totalorder %v1485, 0
        %v1487 = vsub.s32 0, %v1485
        %v1488 = vsel %vm1486, %v1487, %v1485
        %v1489 = vclz %v1488
        %v1490 = vsub.s32 %v1489, 2
        %vm1491 = vcmp.gt.s32.totalorder 0, %v1490
        %v1492 = vsel %vm1491, 0, %v1490
        %v1493 = vsub.s32 32, %v1492
        %v1494 = vshll.u32 %v1485, %v1492
        %v1495 = vshrl.u32 %v1477, %v1493
        %v1496 = vor.u32 %v1494, %v1495
        %v1497 = vsub.s32 4294967266, %v1492
        %v1498 = vadd.s32 %v1497, 127
        %v1499 = vshll.u32 %v1498, 23
        %v1500 = vor.u32 4788187, %v1499
        %v1501 = vand.u32 2147483647, %v1500
        %v1503 = vcvt.s32.f32 %v1496
        %v1504 = vmul.f32 %v1503, %v1501
        %v1505 = vxor.u32 %v1504, 2147483648
        %v1506 = vsel %vm1423, %v1505, %v1504
        %v1507 = vsub.s32 4, %v1483
        %v1508 = vsel %vm1423, %v1507, %v1483
        %v1509 = vsel %vm1422, %v551, %v1506
        %v1510 = vsel %vm1422, 0, %v1508
        %v1511 = vcosq.f32.pop %v1509
        %v1512 = vsinq.f32.pop %v1509
        %vm1513 = vweird.f32 %v551
        %v1514 = vand.u32 %v1510, 3
        %vm1515 = vcmp.lt.s32.totalorder %v1514, 2
        %vm1516 = vcmp.eq.s32.totalorder %v1514, 0
        %v1517 = vxor.u32 %v1512, 2147483648
        %v1518 = vsel %vm1516, %v1511, %v1517
        %vm1519 = vcmp.eq.s32.totalorder %v1514, 2
        %v1520 = vxor.u32 %v1511, 2147483648
        %v1521 = vsel %vm1519, %v1520, %v1512
        %v1522 = vsel %vm1515, %v1518, %v1521
        %v1523 = vsel %vm1513, nan, %v1522
        %v1524 = vand.u32 2147483647, %v556
        %vm1525 = vcmp.le.f32.partialorder %v1524, 0.7853982
        %vm1526 = vcmp.lt.s32.totalorder %v556, 0
        %v1527 = vand.u32 %v556, 2139095040
        %v1528 = vshrl.u32 %v1527, 23
        %v1529 = vsub.s32 %v1528, 127
        %v1530 = vand.u32 2147483647, %v556
        %v1531 = vand.u32 %v1530, 8388607
        %v1532 = vor.u32 %v1531, 8388608
        %v1533 = vsub.s32 0, %v1532
        %v1534 = vadd.s32 %v1529, 1
        %vm1535 = vcmp.gt.s32.totalorder %v1534, 0
        %v1536 = vsel %vm1535, %v1534, 0
        %v1537 = vshrl.u32 %v1536, 5
        %v1538 = vand.u32 %v1536, 31
        %v1539 = vsub.s32 32, %v1538
        %v1540 = vshrl.u32 683565275, %v1539
        %v1541 = vshll.u32 683565275, %v1538
        %v1542 = vshrl.u32 2475754826, %v1539
        %v1543 = vor.u32 %v1541, %v1542
        %v1544 = vshll.u32 2475754826, %v1538
        %v1545 = vshrl.u32 2131351028, %v1539
        %v1546 = vor.u32 %v1544, %v1545
        %v1547 = vshll.u32 2131351028, %v1538
        %v1548 = vshrl.u32 2102212464, %v1539
        %v1549 = vor.u32 %v1547, %v1548
        %v1550 = vshll.u32 2102212464, %v1538
        %v1551 = vshrl.u32 920167782, %v1539
        %v1552 = vor.u32 %v1550, %v1551
        %v1553 = vshll.u32 920167782, %v1538
        %v1554 = vshrl.u32 1326507024, %v1539
        %v1555 = vor.u32 %v1553, %v1554
        %vm1556 = vcmp.lt.s32.totalorder %v1537, 1
        %vm1557 = vcmp.lt.s32.totalorder %v1537, 2
        %vm1558 = vcmp.lt.s32.totalorder %v1537, 3
        %vm1559 = vcmp.lt.s32.totalorder %v1537, 4
        %v1560 = vsel %vm1556, %v1540, %v1543
        %v1561 = vsel %vm1559, %v1549, 2102212464
        %v1562 = vsel %vm1558, %v1546, %v1561
        %v1563 = vsel %vm1557, %v1560, %v1562
        %v1564 = vsel %vm1556, %v1543, %v1546
        %v1565 = vsel %vm1559, %v1552, 920167782
        %v1566 = vsel %vm1558, %v1549, %v1565
        %v1567 = vsel %vm1557, %v1564, %v1566
        %v1568 = vsel %vm1556, %v1546, %v1549
        %v1569 = vsel %vm1559, %v1555, 1326507024
        %v1570 = vsel %vm1558, %v1552, %v1569
        %v1571 = vsel %vm1557, %v1568, %v1570
        %v1572 = vshll.u32 %v1532, 8
        %v1573 = vmul.u32.u64.compose %v1572, %v1571
        %v1574 = vextract.low.u32 %v1573
        %v1575 = vextract.high.u32 %v1573
        %v1576 = vmul.u32.u64.compose %v1572, %v1567
        %v1577 = vextract.low.u32 %v1576
        %v1578 = vextract.high.u32 %v1576
        %v1579 = vmul.u32 %v1572, %v1563
        %v1580 = vadd.s32 %v1575, %v1577
        %vm1581 = vc.u32 %v1575, %v1577
        %v1582 = vadd.s32 %v1578, 1
        %v1583 = vsel %vm1581, %v1582, %v1578
        %v1584 = vadd.s32 %v1579, %v1583
        %v1585 = vadd.s32 %v1584, 536870912
        %v1586 = vshrl.u32 %v1585, 30
        %v1587 = vshll.u32 %v1586, 30
        %v1588 = vsub.s32 %v1584, %v1587
        %vm1589 = vcmp.lt.s32.totalorder %v1588, 0
        %v1590 = vsub.s32 0, %v1588
        %v1591 = vsel %vm1589, %v1590, %v1588
        %v1592 = vclz %v1591
        %v1593 = vsub.s32 %v1592, 2
        %vm1594 = vcmp.gt.s32.totalorder 0, %v1593
        %v1595 = vsel %vm1594, 0, %v1593
        %v1596 = vsub.s32 32, %v1595
        %v1597 = vshll.u32 %v1588, %v1595
        %v1598 = vshrl.u32 %v1580, %v1596
        %v1599 = vor.u32 %v1597, %v1598
        %v1600 = vsub.s32 4294967266, %v1595
        %v1601 = vadd.s32 %v1600, 127
        %v1602 = vshll.u32 %v1601, 23
        %v1603 = vor.u32 4788187, %v1602
        %v1604 = vand.u32 2147483647, %v1603
        %v1606 = vcvt.s32.f32 %v1599
        %v1607 = vmul.f32 %v1606, %v1604
        %v1608 = vxor.u32 %v1607, 2147483648
        %v1609 = vsel %vm1526, %v1608, %v1607
        %v1610 = vsub.s32 4, %v1586
        %v1611 = vsel %vm1526, %v1610, %v1586
        %v1612 = vsel %vm1525, %v556, %v1609
        %v1613 = vsel %vm1525, 0, %v1611
        %v1614 = vcosq.f32.pop %v1612
        %v1615 = vsinq.f32.pop %v1612
        %vm1616 = vweird.f32 %v556
        %v1617 = vand.u32 %v1613, 3
        %vm1618 = vcmp.lt.s32.totalorder %v1617, 2
        %vm1619 = vcmp.eq.s32.totalorder %v1617, 0
        %v1620 = vxor.u32 %v1615, 2147483648
        %v1621 = vsel %vm1619, %v1614, %v1620
        %vm1622 = vcmp.eq.s32.totalorder %v1617, 2
        %v1623 = vxor.u32 %v1614, 2147483648
        %v1624 = vsel %vm1622, %v1623, %v1615
        %v1625 = vsel %vm1618, %v1621, %v1624
        %v1626 = vsel %vm1616, nan, %v1625
        %v1627 = vand.u32 2147483647, %v561
        %vm1628 = vcmp.le.f32.partialorder %v1627, 0.7853982
        %vm1629 = vcmp.lt.s32.totalorder %v561, 0
        %v1630 = vand.u32 %v561, 2139095040
        %v1631 = vshrl.u32 %v1630, 23
        %v1632 = vsub.s32 %v1631, 127
        %v1633 = vand.u32 2147483647, %v561
        %v1634 = vand.u32 %v1633, 8388607
        %v1635 = vor.u32 %v1634, 8388608
        %v1636 = vsub.s32 0, %v1635
        %v1637 = vadd.s32 %v1632, 1
        %vm1638 = vcmp.gt.s32.totalorder %v1637, 0
        %v1639 = vsel %vm1638, %v1637, 0
        %v1640 = vshrl.u32 %v1639, 5
        %v1641 = vand.u32 %v1639, 31
        %v1642 = vsub.s32 32, %v1641
        %v1643 = vshrl.u32 683565275, %v1642
        %v1644 = vshll.u32 683565275, %v1641
        %v1645 = vshrl.u32 2475754826, %v1642
        %v1646 = vor.u32 %v1644, %v1645
        %v1647 = vshll.u32 2475754826, %v1641
        %v1648 = vshrl.u32 2131351028, %v1642
        %v1649 = vor.u32 %v1647, %v1648
        %v1650 = vshll.u32 2131351028, %v1641
        %v1651 = vshrl.u32 2102212464, %v1642
        %v1652 = vor.u32 %v1650, %v1651
        %v1653 = vshll.u32 2102212464, %v1641
        %v1654 = vshrl.u32 920167782, %v1642
        %v1655 = vor.u32 %v1653, %v1654
        %v1656 = vshll.u32 920167782, %v1641
        %v1657 = vshrl.u32 1326507024, %v1642
        %v1658 = vor.u32 %v1656, %v1657
        %vm1659 = vcmp.lt.s32.totalorder %v1640, 1
        %vm1660 = vcmp.lt.s32.totalorder %v1640, 2
        %vm1661 = vcmp.lt.s32.totalorder %v1640, 3
        %vm1662 = vcmp.lt.s32.totalorder %v1640, 4
        %v1663 = vsel %vm1659, %v1643, %v1646
        %v1664 = vsel %vm1662, %v1652, 2102212464
        %v1665 = vsel %vm1661, %v1649, %v1664
        %v1666 = vsel %vm1660, %v1663, %v1665
        %v1667 = vsel %vm1659, %v1646, %v1649
        %v1668 = vsel %vm1662, %v1655, 920167782
        %v1669 = vsel %vm1661, %v1652, %v1668
        %v1670 = vsel %vm1660, %v1667, %v1669
        %v1671 = vsel %vm1659, %v1649, %v1652
        %v1672 = vsel %vm1662, %v1658, 1326507024
        %v1673 = vsel %vm1661, %v1655, %v1672
        %v1674 = vsel %vm1660, %v1671, %v1673
        %v1675 = vshll.u32 %v1635, 8
        %v1676 = vmul.u32.u64.compose %v1675, %v1674
        %v1677 = vextract.low.u32 %v1676
        %v1678 = vextract.high.u32 %v1676
        %v1679 = vmul.u32.u64.compose %v1675, %v1670
        %v1680 = vextract.low.u32 %v1679
        %v1681 = vextract.high.u32 %v1679
        %v1682 = vmul.u32 %v1675, %v1666
        %v1683 = vadd.s32 %v1678, %v1680
        %vm1684 = vc.u32 %v1678, %v1680
        %v1685 = vadd.s32 %v1681, 1
        %v1686 = vsel %vm1684, %v1685, %v1681
        %v1687 = vadd.s32 %v1682, %v1686
        %v1688 = vadd.s32 %v1687, 536870912
        %v1689 = vshrl.u32 %v1688, 30
        %v1690 = vshll.u32 %v1689, 30
        %v1691 = vsub.s32 %v1687, %v1690
        %vm1692 = vcmp.lt.s32.totalorder %v1691, 0
        %v1693 = vsub.s32 0, %v1691
        %v1694 = vsel %vm1692, %v1693, %v1691
        %v1695 = vclz %v1694
        %v1696 = vsub.s32 %v1695, 2
        %vm1697 = vcmp.gt.s32.totalorder 0, %v1696
        %v1698 = vsel %vm1697, 0, %v1696
        %v1699 = vsub.s32 32, %v1698
        %v1700 = vshll.u32 %v1691, %v1698
        %v1701 = vshrl.u32 %v1683, %v1699
        %v1702 = vor.u32 %v1700, %v1701
        %v1703 = vsub.s32 4294967266, %v1698
        %v1704 = vadd.s32 %v1703, 127
        %v1705 = vshll.u32 %v1704, 23
        %v1706 = vor.u32 4788187, %v1705
        %v1707 = vand.u32 2147483647, %v1706
        %v1709 = vcvt.s32.f32 %v1702
        %v1710 = vmul.f32 %v1709, %v1707
        %v1711 = vxor.u32 %v1710, 2147483648
        %v1712 = vsel %vm1629, %v1711, %v1710
        %v1713 = vsub.s32 4, %v1689
        %v1714 = vsel %vm1629, %v1713, %v1689
        %v1715 = vsel %vm1628, %v561, %v1712
        %v1716 = vsel %vm1628, 0, %v1714
        %v1717 = vcosq.f32.pop %v1715
        %v1718 = vsinq.f32.pop %v1715
        %vm1719 = vweird.f32 %v561
        %v1720 = vand.u32 %v1716, 3
        %vm1721 = vcmp.lt.s32.totalorder %v1720, 2
        %vm1722 = vcmp.eq.s32.totalorder %v1720, 0
        %v1723 = vxor.u32 %v1718, 2147483648
        %v1724 = vsel %vm1722, %v1717, %v1723
        %vm1725 = vcmp.eq.s32.totalorder %v1720, 2
        %v1726 = vxor.u32 %v1717, 2147483648
        %v1727 = vsel %vm1725, %v1726, %v1718
        %v1728 = vsel %vm1721, %v1724, %v1727
        %v1729 = vsel %vm1719, nan, %v1728
        %v1730 = vand.u32 2147483647, %v566
        %vm1731 = vcmp.le.f32.partialorder %v1730, 0.7853982
        %vm1732 = vcmp.lt.s32.totalorder %v566, 0
        %v1733 = vand.u32 %v566, 2139095040
        %v1734 = vshrl.u32 %v1733, 23
        %v1735 = vsub.s32 %v1734, 127
        %v1736 = vand.u32 2147483647, %v566
        %v1737 = vand.u32 %v1736, 8388607
        %v1738 = vor.u32 %v1737, 8388608
        %v1739 = vsub.s32 0, %v1738
        %v1740 = vadd.s32 %v1735, 1
        %vm1741 = vcmp.gt.s32.totalorder %v1740, 0
        %v1742 = vsel %vm1741, %v1740, 0
        %v1743 = vshrl.u32 %v1742, 5
        %v1744 = vand.u32 %v1742, 31
        %v1745 = vsub.s32 32, %v1744
        %v1746 = vshrl.u32 683565275, %v1745
        %v1747 = vshll.u32 683565275, %v1744
        %v1748 = vshrl.u32 2475754826, %v1745
        %v1749 = vor.u32 %v1747, %v1748
        %v1750 = vshll.u32 2475754826, %v1744
        %v1751 = vshrl.u32 2131351028, %v1745
        %v1752 = vor.u32 %v1750, %v1751
        %v1753 = vshll.u32 2131351028, %v1744
        %v1754 = vshrl.u32 2102212464, %v1745
        %v1755 = vor.u32 %v1753, %v1754
        %v1756 = vshll.u32 2102212464, %v1744
        %v1757 = vshrl.u32 920167782, %v1745
        %v1758 = vor.u32 %v1756, %v1757
        %v1759 = vshll.u32 920167782, %v1744
        %v1760 = vshrl.u32 1326507024, %v1745
        %v1761 = vor.u32 %v1759, %v1760
        %vm1762 = vcmp.lt.s32.totalorder %v1743, 1
        %vm1763 = vcmp.lt.s32.totalorder %v1743, 2
        %vm1764 = vcmp.lt.s32.totalorder %v1743, 3
        %vm1765 = vcmp.lt.s32.totalorder %v1743, 4
        %v1766 = vsel %vm1762, %v1746, %v1749
        %v1767 = vsel %vm1765, %v1755, 2102212464
        %v1768 = vsel %vm1764, %v1752, %v1767
        %v1769 = vsel %vm1763, %v1766, %v1768
        %v1770 = vsel %vm1762, %v1749, %v1752
        %v1771 = vsel %vm1765, %v1758, 920167782
        %v1772 = vsel %vm1764, %v1755, %v1771
        %v1773 = vsel %vm1763, %v1770, %v1772
        %v1774 = vsel %vm1762, %v1752, %v1755
        %v1775 = vsel %vm1765, %v1761, 1326507024
        %v1776 = vsel %vm1764, %v1758, %v1775
        %v1777 = vsel %vm1763, %v1774, %v1776
        %v1778 = vshll.u32 %v1738, 8
        %v1779 = vmul.u32.u64.compose %v1778, %v1777
        %v1780 = vextract.low.u32 %v1779
        %v1781 = vextract.high.u32 %v1779
        %v1782 = vmul.u32.u64.compose %v1778, %v1773
        %v1783 = vextract.low.u32 %v1782
        %v1784 = vextract.high.u32 %v1782
        %v1785 = vmul.u32 %v1778, %v1769
        %v1786 = vadd.s32 %v1781, %v1783
        %vm1787 = vc.u32 %v1781, %v1783
        %v1788 = vadd.s32 %v1784, 1
        %v1789 = vsel %vm1787, %v1788, %v1784
        %v1790 = vadd.s32 %v1785, %v1789
        %v1791 = vadd.s32 %v1790, 536870912
        %v1792 = vshrl.u32 %v1791, 30
        %v1793 = vshll.u32 %v1792, 30
        %v1794 = vsub.s32 %v1790, %v1793
        %vm1795 = vcmp.lt.s32.totalorder %v1794, 0
        %v1796 = vsub.s32 0, %v1794
        %v1797 = vsel %vm1795, %v1796, %v1794
        %v1798 = vclz %v1797
        %v1799 = vsub.s32 %v1798, 2
        %vm1800 = vcmp.gt.s32.totalorder 0, %v1799
        %v1801 = vsel %vm1800, 0, %v1799
        %v1802 = vsub.s32 32, %v1801
        %v1803 = vshll.u32 %v1794, %v1801
        %v1804 = vshrl.u32 %v1786, %v1802
        %v1805 = vor.u32 %v1803, %v1804
        %v1806 = vsub.s32 4294967266, %v1801
        %v1807 = vadd.s32 %v1806, 127
        %v1808 = vshll.u32 %v1807, 23
        %v1809 = vor.u32 4788187, %v1808
        %v1810 = vand.u32 2147483647, %v1809
        %v1812 = vcvt.s32.f32 %v1805
        %v1813 = vmul.f32 %v1812, %v1810
        %v1814 = vxor.u32 %v1813, 2147483648
        %v1815 = vsel %vm1732, %v1814, %v1813
        %v1816 = vsub.s32 4, %v1792
        %v1817 = vsel %vm1732, %v1816, %v1792
        %v1818 = vsel %vm1731, %v566, %v1815
        %v1819 = vsel %vm1731, 0, %v1817
        %v1820 = vcosq.f32.pop %v1818
        %v1821 = vsinq.f32.pop %v1818
        %vm1822 = vweird.f32 %v566
        %v1823 = vand.u32 %v1819, 3
        %vm1824 = vcmp.lt.s32.totalorder %v1823, 2
        %vm1825 = vcmp.eq.s32.totalorder %v1823, 0
        %v1826 = vxor.u32 %v1821, 2147483648
        %v1827 = vsel %vm1825, %v1820, %v1826
        %vm1828 = vcmp.eq.s32.totalorder %v1823, 2
        %v1829 = vxor.u32 %v1820, 2147483648
        %v1830 = vsel %vm1828, %v1829, %v1821
        %v1831 = vsel %vm1824, %v1827, %v1830
        %v1832 = vsel %vm1822, nan, %v1831
        %v1833 = vand.u32 2147483647, %v571
        %vm1834 = vcmp.le.f32.partialorder %v1833, 0.7853982
        %vm1835 = vcmp.lt.s32.totalorder %v571, 0
        %v1836 = vand.u32 %v571, 2139095040
        %v1837 = vshrl.u32 %v1836, 23
        %v1838 = vsub.s32 %v1837, 127
        %v1839 = vand.u32 2147483647, %v571
        %v1840 = vand.u32 %v1839, 8388607
        %v1841 = vor.u32 %v1840, 8388608
        %v1842 = vsub.s32 0, %v1841
        %v1843 = vadd.s32 %v1838, 1
        %vm1844 = vcmp.gt.s32.totalorder %v1843, 0
        %v1845 = vsel %vm1844, %v1843, 0
        %v1846 = vshrl.u32 %v1845, 5
        %v1847 = vand.u32 %v1845, 31
        %v1848 = vsub.s32 32, %v1847
        %v1849 = vshrl.u32 683565275, %v1848
        %v1850 = vshll.u32 683565275, %v1847
        %v1851 = vshrl.u32 2475754826, %v1848
        %v1852 = vor.u32 %v1850, %v1851
        %v1853 = vshll.u32 2475754826, %v1847
        %v1854 = vshrl.u32 2131351028, %v1848
        %v1855 = vor.u32 %v1853, %v1854
        %v1856 = vshll.u32 2131351028, %v1847
        %v1857 = vshrl.u32 2102212464, %v1848
        %v1858 = vor.u32 %v1856, %v1857
        %v1859 = vshll.u32 2102212464, %v1847
        %v1860 = vshrl.u32 920167782, %v1848
        %v1861 = vor.u32 %v1859, %v1860
        %v1862 = vshll.u32 920167782, %v1847
        %v1863 = vshrl.u32 1326507024, %v1848
        %v1864 = vor.u32 %v1862, %v1863
        %vm1865 = vcmp.lt.s32.totalorder %v1846, 1
        %vm1866 = vcmp.lt.s32.totalorder %v1846, 2
        %vm1867 = vcmp.lt.s32.totalorder %v1846, 3
        %vm1868 = vcmp.lt.s32.totalorder %v1846, 4
        %v1869 = vsel %vm1865, %v1849, %v1852
        %v1870 = vsel %vm1868, %v1858, 2102212464
        %v1871 = vsel %vm1867, %v1855, %v1870
        %v1872 = vsel %vm1866, %v1869, %v1871
        %v1873 = vsel %vm1865, %v1852, %v1855
        %v1874 = vsel %vm1868, %v1861, 920167782
        %v1875 = vsel %vm1867, %v1858, %v1874
        %v1876 = vsel %vm1866, %v1873, %v1875
        %v1877 = vsel %vm1865, %v1855, %v1858
        %v1878 = vsel %vm1868, %v1864, 1326507024
        %v1879 = vsel %vm1867, %v1861, %v1878
        %v1880 = vsel %vm1866, %v1877, %v1879
        %v1881 = vshll.u32 %v1841, 8
        %v1882 = vmul.u32.u64.compose %v1881, %v1880
        %v1883 = vextract.low.u32 %v1882
        %v1884 = vextract.high.u32 %v1882
        %v1885 = vmul.u32.u64.compose %v1881, %v1876
        %v1886 = vextract.low.u32 %v1885
        %v1887 = vextract.high.u32 %v1885
        %v1888 = vmul.u32 %v1881, %v1872
        %v1889 = vadd.s32 %v1884, %v1886
        %vm1890 = vc.u32 %v1884, %v1886
        %v1891 = vadd.s32 %v1887, 1
        %v1892 = vsel %vm1890, %v1891, %v1887
        %v1893 = vadd.s32 %v1888, %v1892
        %v1894 = vadd.s32 %v1893, 536870912
        %v1895 = vshrl.u32 %v1894, 30
        %v1896 = vshll.u32 %v1895, 30
        %v1897 = vsub.s32 %v1893, %v1896
        %vm1898 = vcmp.lt.s32.totalorder %v1897, 0
        %v1899 = vsub.s32 0, %v1897
        %v1900 = vsel %vm1898, %v1899, %v1897
        %v1901 = vclz %v1900
        %v1902 = vsub.s32 %v1901, 2
        %vm1903 = vcmp.gt.s32.totalorder 0, %v1902
        %v1904 = vsel %vm1903, 0, %v1902
        %v1905 = vsub.s32 32, %v1904
        %v1906 = vshll.u32 %v1897, %v1904
        %v1907 = vshrl.u32 %v1889, %v1905
        %v1908 = vor.u32 %v1906, %v1907
        %v1909 = vsub.s32 4294967266, %v1904
        %v1910 = vadd.s32 %v1909, 127
        %v1911 = vshll.u32 %v1910, 23
        %v1912 = vor.u32 4788187, %v1911
        %v1913 = vand.u32 2147483647, %v1912
        %v1915 = vcvt.s32.f32 %v1908
        %v1916 = vmul.f32 %v1915, %v1913
        %v1917 = vxor.u32 %v1916, 2147483648
        %v1918 = vsel %vm1835, %v1917, %v1916
        %v1919 = vsub.s32 4, %v1895
        %v1920 = vsel %vm1835, %v1919, %v1895
        %v1921 = vsel %vm1834, %v571, %v1918
        %v1922 = vsel %vm1834, 0, %v1920
        %v1923 = vcosq.f32.pop %v1921
        %v1924 = vsinq.f32.pop %v1921
        %vm1925 = vweird.f32 %v571
        %v1926 = vand.u32 %v1922, 3
        %vm1927 = vcmp.lt.s32.totalorder %v1926, 2
        %vm1928 = vcmp.eq.s32.totalorder %v1926, 0
        %v1929 = vxor.u32 %v1924, 2147483648
        %v1930 = vsel %vm1928, %v1923, %v1929
        %vm1931 = vcmp.eq.s32.totalorder %v1926, 2
        %v1932 = vxor.u32 %v1923, 2147483648
        %v1933 = vsel %vm1931, %v1932, %v1924
        %v1934 = vsel %vm1927, %v1930, %v1933
        %v1935 = vsel %vm1925, nan, %v1934
        %v1936 = vand.u32 2147483647, %v576
        %vm1937 = vcmp.le.f32.partialorder %v1936, 0.7853982
        %vm1938 = vcmp.lt.s32.totalorder %v576, 0
        %v1939 = vand.u32 %v576, 2139095040
        %v1940 = vshrl.u32 %v1939, 23
        %v1941 = vsub.s32 %v1940, 127
        %v1942 = vand.u32 2147483647, %v576
        %v1943 = vand.u32 %v1942, 8388607
        %v1944 = vor.u32 %v1943, 8388608
        %v1945 = vsub.s32 0, %v1944
        %v1946 = vadd.s32 %v1941, 1
        %vm1947 = vcmp.gt.s32.totalorder %v1946, 0
        %v1948 = vsel %vm1947, %v1946, 0
        %v1949 = vshrl.u32 %v1948, 5
        %v1950 = vand.u32 %v1948, 31
        %v1951 = vsub.s32 32, %v1950
        %v1952 = vshrl.u32 683565275, %v1951
        %v1953 = vshll.u32 683565275, %v1950
        %v1954 = vshrl.u32 2475754826, %v1951
        %v1955 = vor.u32 %v1953, %v1954
        %v1956 = vshll.u32 2475754826, %v1950
        %v1957 = vshrl.u32 2131351028, %v1951
        %v1958 = vor.u32 %v1956, %v1957
        %v1959 = vshll.u32 2131351028, %v1950
        %v1960 = vshrl.u32 2102212464, %v1951
        %v1961 = vor.u32 %v1959, %v1960
        %v1962 = vshll.u32 2102212464, %v1950
        %v1963 = vshrl.u32 920167782, %v1951
        %v1964 = vor.u32 %v1962, %v1963
        %v1965 = vshll.u32 920167782, %v1950
        %v1966 = vshrl.u32 1326507024, %v1951
        %v1967 = vor.u32 %v1965, %v1966
        %vm1968 = vcmp.lt.s32.totalorder %v1949, 1
        %vm1969 = vcmp.lt.s32.totalorder %v1949, 2
        %vm1970 = vcmp.lt.s32.totalorder %v1949, 3
        %vm1971 = vcmp.lt.s32.totalorder %v1949, 4
        %v1972 = vsel %vm1968, %v1952, %v1955
        %v1973 = vsel %vm1971, %v1961, 2102212464
        %v1974 = vsel %vm1970, %v1958, %v1973
        %v1975 = vsel %vm1969, %v1972, %v1974
        %v1976 = vsel %vm1968, %v1955, %v1958
        %v1977 = vsel %vm1971, %v1964, 920167782
        %v1978 = vsel %vm1970, %v1961, %v1977
        %v1979 = vsel %vm1969, %v1976, %v1978
        %v1980 = vsel %vm1968, %v1958, %v1961
        %v1981 = vsel %vm1971, %v1967, 1326507024
        %v1982 = vsel %vm1970, %v1964, %v1981
        %v1983 = vsel %vm1969, %v1980, %v1982
        %v1984 = vshll.u32 %v1944, 8
        %v1985 = vmul.u32.u64.compose %v1984, %v1983
        %v1986 = vextract.low.u32 %v1985
        %v1987 = vextract.high.u32 %v1985
        %v1988 = vmul.u32.u64.compose %v1984, %v1979
        %v1989 = vextract.low.u32 %v1988
        %v1990 = vextract.high.u32 %v1988
        %v1991 = vmul.u32 %v1984, %v1975
        %v1992 = vadd.s32 %v1987, %v1989
        %vm1993 = vc.u32 %v1987, %v1989
        %v1994 = vadd.s32 %v1990, 1
        %v1995 = vsel %vm1993, %v1994, %v1990
        %v1996 = vadd.s32 %v1991, %v1995
        %v1997 = vadd.s32 %v1996, 536870912
        %v1998 = vshrl.u32 %v1997, 30
        %v1999 = vshll.u32 %v1998, 30
        %v2000 = vsub.s32 %v1996, %v1999
        %vm2001 = vcmp.lt.s32.totalorder %v2000, 0
        %v2002 = vsub.s32 0, %v2000
        %v2003 = vsel %vm2001, %v2002, %v2000
        %v2004 = vclz %v2003
        %v2005 = vsub.s32 %v2004, 2
        %vm2006 = vcmp.gt.s32.totalorder 0, %v2005
        %v2007 = vsel %vm2006, 0, %v2005
        %v2008 = vsub.s32 32, %v2007
        %v2009 = vshll.u32 %v2000, %v2007
        %v2010 = vshrl.u32 %v1992, %v2008
        %v2011 = vor.u32 %v2009, %v2010
        %v2012 = vsub.s32 4294967266, %v2007
        %v2013 = vadd.s32 %v2012, 127
        %v2014 = vshll.u32 %v2013, 23
        %v2015 = vor.u32 4788187, %v2014
        %v2016 = vand.u32 2147483647, %v2015
        %v2018 = vcvt.s32.f32 %v2011
        %v2019 = vmul.f32 %v2018, %v2016
        %v2020 = vxor.u32 %v2019, 2147483648
        %v2021 = vsel %vm1938, %v2020, %v2019
        %v2022 = vsub.s32 4, %v1998
        %v2023 = vsel %vm1938, %v2022, %v1998
        %v2024 = vsel %vm1937, %v576, %v2021
        %v2025 = vsel %vm1937, 0, %v2023
        %v2026 = vcosq.f32.pop %v2024
        %v2027 = vsinq.f32.pop %v2024
        %vm2028 = vweird.f32 %v576
        %v2029 = vand.u32 %v2025, 3
        %vm2030 = vcmp.lt.s32.totalorder %v2029, 2
        %vm2031 = vcmp.eq.s32.totalorder %v2029, 0
        %v2032 = vxor.u32 %v2027, 2147483648
        %v2033 = vsel %vm2031, %v2026, %v2032
        %vm2034 = vcmp.eq.s32.totalorder %v2029, 2
        %v2035 = vxor.u32 %v2026, 2147483648
        %v2036 = vsel %vm2034, %v2035, %v2027
        %v2037 = vsel %vm2030, %v2033, %v2036
        %v2038 = vsel %vm2028, nan, %v2037
        %v2039 = vand.u32 2147483647, %v581
        %vm2040 = vcmp.le.f32.partialorder %v2039, 0.7853982
        %vm2041 = vcmp.lt.s32.totalorder %v581, 0
        %v2042 = vand.u32 %v581, 2139095040
        %v2043 = vshrl.u32 %v2042, 23
        %v2044 = vsub.s32 %v2043, 127
        %v2045 = vand.u32 2147483647, %v581
        %v2046 = vand.u32 %v2045, 8388607
        %v2047 = vor.u32 %v2046, 8388608
        %v2048 = vsub.s32 0, %v2047
        %v2049 = vadd.s32 %v2044, 1
        %vm2050 = vcmp.gt.s32.totalorder %v2049, 0
        %v2051 = vsel %vm2050, %v2049, 0
        %v2052 = vshrl.u32 %v2051, 5
        %v2053 = vand.u32 %v2051, 31
        %v2054 = vsub.s32 32, %v2053
        %v2055 = vshrl.u32 683565275, %v2054
        %v2056 = vshll.u32 683565275, %v2053
        %v2057 = vshrl.u32 2475754826, %v2054
        %v2058 = vor.u32 %v2056, %v2057
        %v2059 = vshll.u32 2475754826, %v2053
        %v2060 = vshrl.u32 2131351028, %v2054
        %v2061 = vor.u32 %v2059, %v2060
        %v2062 = vshll.u32 2131351028, %v2053
        %v2063 = vshrl.u32 2102212464, %v2054
        %v2064 = vor.u32 %v2062, %v2063
        %v2065 = vshll.u32 2102212464, %v2053
        %v2066 = vshrl.u32 920167782, %v2054
        %v2067 = vor.u32 %v2065, %v2066
        %v2068 = vshll.u32 920167782, %v2053
        %v2069 = vshrl.u32 1326507024, %v2054
        %v2070 = vor.u32 %v2068, %v2069
        %vm2071 = vcmp.lt.s32.totalorder %v2052, 1
        %vm2072 = vcmp.lt.s32.totalorder %v2052, 2
        %vm2073 = vcmp.lt.s32.totalorder %v2052, 3
        %vm2074 = vcmp.lt.s32.totalorder %v2052, 4
        %v2075 = vsel %vm2071, %v2055, %v2058
        %v2076 = vsel %vm2074, %v2064, 2102212464
        %v2077 = vsel %vm2073, %v2061, %v2076
        %v2078 = vsel %vm2072, %v2075, %v2077
        %v2079 = vsel %vm2071, %v2058, %v2061
        %v2080 = vsel %vm2074, %v2067, 920167782
        %v2081 = vsel %vm2073, %v2064, %v2080
        %v2082 = vsel %vm2072, %v2079, %v2081
        %v2083 = vsel %vm2071, %v2061, %v2064
        %v2084 = vsel %vm2074, %v2070, 1326507024
        %v2085 = vsel %vm2073, %v2067, %v2084
        %v2086 = vsel %vm2072, %v2083, %v2085
        %v2087 = vshll.u32 %v2047, 8
        %v2088 = vmul.u32.u64.compose %v2087, %v2086
        %v2089 = vextract.low.u32 %v2088
        %v2090 = vextract.high.u32 %v2088
        %v2091 = vmul.u32.u64.compose %v2087, %v2082
        %v2092 = vextract.low.u32 %v2091
        %v2093 = vextract.high.u32 %v2091
        %v2094 = vmul.u32 %v2087, %v2078
        %v2095 = vadd.s32 %v2090, %v2092
        %vm2096 = vc.u32 %v2090, %v2092
        %v2097 = vadd.s32 %v2093, 1
        %v2098 = vsel %vm2096, %v2097, %v2093
        %v2099 = vadd.s32 %v2094, %v2098
        %v2100 = vadd.s32 %v2099, 536870912
        %v2101 = vshrl.u32 %v2100, 30
        %v2102 = vshll.u32 %v2101, 30
        %v2103 = vsub.s32 %v2099, %v2102
        %vm2104 = vcmp.lt.s32.totalorder %v2103, 0
        %v2105 = vsub.s32 0, %v2103
        %v2106 = vsel %vm2104, %v2105, %v2103
        %v2107 = vclz %v2106
        %v2108 = vsub.s32 %v2107, 2
        %vm2109 = vcmp.gt.s32.totalorder 0, %v2108
        %v2110 = vsel %vm2109, 0, %v2108
        %v2111 = vsub.s32 32, %v2110
        %v2112 = vshll.u32 %v2103, %v2110
        %v2113 = vshrl.u32 %v2095, %v2111
        %v2114 = vor.u32 %v2112, %v2113
        %v2115 = vsub.s32 4294967266, %v2110
        %v2116 = vadd.s32 %v2115, 127
        %v2117 = vshll.u32 %v2116, 23
        %v2118 = vor.u32 4788187, %v2117
        %v2119 = vand.u32 2147483647, %v2118
        %v2121 = vcvt.s32.f32 %v2114
        %v2122 = vmul.f32 %v2121, %v2119
        %v2123 = vxor.u32 %v2122, 2147483648
        %v2124 = vsel %vm2041, %v2123, %v2122
        %v2125 = vsub.s32 4, %v2101
        %v2126 = vsel %vm2041, %v2125, %v2101
        %v2127 = vsel %vm2040, %v581, %v2124
        %v2128 = vsel %vm2040, 0, %v2126
        %v2129 = vcosq.f32.pop %v2127
        %v2130 = vsinq.f32.pop %v2127
        %vm2131 = vweird.f32 %v581
        %v2132 = vand.u32 %v2128, 3
        %vm2133 = vcmp.lt.s32.totalorder %v2132, 2
        %vm2134 = vcmp.eq.s32.totalorder %v2132, 0
        %v2135 = vxor.u32 %v2130, 2147483648
        %v2136 = vsel %vm2134, %v2129, %v2135
        %vm2137 = vcmp.eq.s32.totalorder %v2132, 2
        %v2138 = vxor.u32 %v2129, 2147483648
        %v2139 = vsel %vm2137, %v2138, %v2130
        %v2140 = vsel %vm2133, %v2136, %v2139
        %v2141 = vsel %vm2131, nan, %v2140
        %v2142 = vand.u32 2147483647, %v586
        %vm2143 = vcmp.le.f32.partialorder %v2142, 0.7853982
        %vm2144 = vcmp.lt.s32.totalorder %v586, 0
        %v2145 = vand.u32 %v586, 2139095040
        %v2146 = vshrl.u32 %v2145, 23
        %v2147 = vsub.s32 %v2146, 127
        %v2148 = vand.u32 2147483647, %v586
        %v2149 = vand.u32 %v2148, 8388607
        %v2150 = vor.u32 %v2149, 8388608
        %v2151 = vsub.s32 0, %v2150
        %v2152 = vadd.s32 %v2147, 1
        %vm2153 = vcmp.gt.s32.totalorder %v2152, 0
        %v2154 = vsel %vm2153, %v2152, 0
        %v2155 = vshrl.u32 %v2154, 5
        %v2156 = vand.u32 %v2154, 31
        %v2157 = vsub.s32 32, %v2156
        %v2158 = vshrl.u32 683565275, %v2157
        %v2159 = vshll.u32 683565275, %v2156
        %v2160 = vshrl.u32 2475754826, %v2157
        %v2161 = vor.u32 %v2159, %v2160
        %v2162 = vshll.u32 2475754826, %v2156
        %v2163 = vshrl.u32 2131351028, %v2157
        %v2164 = vor.u32 %v2162, %v2163
        %v2165 = vshll.u32 2131351028, %v2156
        %v2166 = vshrl.u32 2102212464, %v2157
        %v2167 = vor.u32 %v2165, %v2166
        %v2168 = vshll.u32 2102212464, %v2156
        %v2169 = vshrl.u32 920167782, %v2157
        %v2170 = vor.u32 %v2168, %v2169
        %v2171 = vshll.u32 920167782, %v2156
        %v2172 = vshrl.u32 1326507024, %v2157
        %v2173 = vor.u32 %v2171, %v2172
        %vm2174 = vcmp.lt.s32.totalorder %v2155, 1
        %vm2175 = vcmp.lt.s32.totalorder %v2155, 2
        %vm2176 = vcmp.lt.s32.totalorder %v2155, 3
        %vm2177 = vcmp.lt.s32.totalorder %v2155, 4
        %v2178 = vsel %vm2174, %v2158, %v2161
        %v2179 = vsel %vm2177, %v2167, 2102212464
        %v2180 = vsel %vm2176, %v2164, %v2179
        %v2181 = vsel %vm2175, %v2178, %v2180
        %v2182 = vsel %vm2174, %v2161, %v2164
        %v2183 = vsel %vm2177, %v2170, 920167782
        %v2184 = vsel %vm2176, %v2167, %v2183
        %v2185 = vsel %vm2175, %v2182, %v2184
        %v2186 = vsel %vm2174, %v2164, %v2167
        %v2187 = vsel %vm2177, %v2173, 1326507024
        %v2188 = vsel %vm2176, %v2170, %v2187
        %v2189 = vsel %vm2175, %v2186, %v2188
        %v2190 = vshll.u32 %v2150, 8
        %v2191 = vmul.u32.u64.compose %v2190, %v2189
        %v2192 = vextract.low.u32 %v2191
        %v2193 = vextract.high.u32 %v2191
        %v2194 = vmul.u32.u64.compose %v2190, %v2185
        %v2195 = vextract.low.u32 %v2194
        %v2196 = vextract.high.u32 %v2194
        %v2197 = vmul.u32 %v2190, %v2181
        %v2198 = vadd.s32 %v2193, %v2195
        %vm2199 = vc.u32 %v2193, %v2195
        %v2200 = vadd.s32 %v2196, 1
        %v2201 = vsel %vm2199, %v2200, %v2196
        %v2202 = vadd.s32 %v2197, %v2201
        %v2203 = vadd.s32 %v2202, 536870912
        %v2204 = vshrl.u32 %v2203, 30
        %v2205 = vshll.u32 %v2204, 30
        %v2206 = vsub.s32 %v2202, %v2205
        %vm2207 = vcmp.lt.s32.totalorder %v2206, 0
        %v2208 = vsub.s32 0, %v2206
        %v2209 = vsel %vm2207, %v2208, %v2206
        %v2210 = vclz %v2209
        %v2211 = vsub.s32 %v2210, 2
        %vm2212 = vcmp.gt.s32.totalorder 0, %v2211
        %v2213 = vsel %vm2212, 0, %v2211
        %v2214 = vsub.s32 32, %v2213
        %v2215 = vshll.u32 %v2206, %v2213
        %v2216 = vshrl.u32 %v2198, %v2214
        %v2217 = vor.u32 %v2215, %v2216
        %v2218 = vsub.s32 4294967266, %v2213
        %v2219 = vadd.s32 %v2218, 127
        %v2220 = vshll.u32 %v2219, 23
        %v2221 = vor.u32 4788187, %v2220
        %v2222 = vand.u32 2147483647, %v2221
        %v2224 = vcvt.s32.f32 %v2217
        %v2225 = vmul.f32 %v2224, %v2222
        %v2226 = vxor.u32 %v2225, 2147483648
        %v2227 = vsel %vm2144, %v2226, %v2225
        %v2228 = vsub.s32 4, %v2204
        %v2229 = vsel %vm2144, %v2228, %v2204
        %v2230 = vsel %vm2143, %v586, %v2227
        %v2231 = vsel %vm2143, 0, %v2229
        %v2232 = vcosq.f32.pop %v2230
        %v2233 = vsinq.f32.pop %v2230
        %vm2234 = vweird.f32 %v586
        %v2235 = vand.u32 %v2231, 3
        %vm2236 = vcmp.lt.s32.totalorder %v2235, 2
        %vm2237 = vcmp.eq.s32.totalorder %v2235, 0
        %v2238 = vxor.u32 %v2233, 2147483648
        %v2239 = vsel %vm2237, %v2232, %v2238
        %vm2240 = vcmp.eq.s32.totalorder %v2235, 2
        %v2241 = vxor.u32 %v2232, 2147483648
        %v2242 = vsel %vm2240, %v2241, %v2233
        %v2243 = vsel %vm2236, %v2239, %v2242
        %v2244 = vsel %vm2234, nan, %v2243
        %2253 = vrot.lane.b32.xlu0 %v692, 8
        %v2254 = vpop.permute.xlu0 %2253
        %2255 = vrot.lane.b32.xlu0 %v796, 8
        %v2256 = vpop.permute.xlu0 %2255
        %2257 = vrot.lane.b32.xlu0 %v900, 8
        %v2258 = vpop.permute.xlu0 %2257
        %2259 = vrot.lane.b32.xlu0 %v1004, 8
        %v2260 = vpop.permute.xlu0 %2259
        %2261 = vrot.lane.b32.xlu0 %v1108, 8
        %v2262 = vpop.permute.xlu0 %2261
        %2263 = vrot.lane.b32.xlu0 %v1212, 8
        %v2264 = vpop.permute.xlu0 %2263
        %2265 = vrot.lane.b32.xlu0 %v1316, 8
        %v2266 = vpop.permute.xlu0 %2265
        %2267 = vrot.lane.b32.xlu0 %v1420, 8
        %v2268 = vpop.permute.xlu0 %2267
        %2285 = vrot.lane.b32.xlu0 %v1523, 24
        %v2286 = vpop.permute.xlu0 %2285
        %2287 = vrot.lane.b32.xlu0 %v1626, 24
        %v2288 = vpop.permute.xlu0 %2287
        %2289 = vrot.lane.b32.xlu0 %v1729, 24
        %v2290 = vpop.permute.xlu0 %2289
        %2291 = vrot.lane.b32.xlu0 %v1832, 24
        %v2292 = vpop.permute.xlu0 %2291
        %2293 = vrot.lane.b32.xlu0 %v1935, 24
        %v2294 = vpop.permute.xlu0 %2293
        %2295 = vrot.lane.b32.xlu0 %v2038, 24
        %v2296 = vpop.permute.xlu0 %2295
        %2297 = vrot.lane.b32.xlu0 %v2141, 24
        %v2298 = vpop.permute.xlu0 %2297
        %2299 = vrot.lane.b32.xlu0 %v2244, 24
        %v2300 = vpop.permute.xlu0 %2299
        %v2309 = vsel %vm459, %v450, %v2254
        %v2310 = vsel %vm459, %v451, %v2256
        %v2311 = vsel %vm459, %v452, %v2258
        %v2312 = vsel %vm459, %v453, %v2260
        %v2313 = vsel %vm459, %v454, %v2262
        %v2314 = vsel %vm459, %v455, %v2264
        %v2315 = vsel %vm459, %v456, %v2266
        %v2316 = vsel %vm459, %v457, %v2268
        %vm2317 = vcmask 195584
        %v2318 = vsel %vm2317, %v2309, %v2286
        %v2319 = vsel %vm2317, %v2310, %v2288
        %v2320 = vsel %vm2317, %v2311, %v2290
        %v2321 = vsel %vm2317, %v2312, %v2292
        %v2322 = vsel %vm2317, %v2313, %v2294
        %v2323 = vsel %vm2317, %v2314, %v2296
        %v2324 = vsel %vm2317, %v2315, %v2298
        %v2325 = vsel %vm2317, %v2316, %v2300
        %v2326 = vld [vmem:[%s3] sm:$0xff]
        %v2327 = vld [vmem:[%s3 + $0x8] sm:$0xff]
        %v2328 = vld [vmem:[%s3 + $0x10] sm:$0xff]
        %v2329 = vld [vmem:[%s3 + $0x18] sm:$0xff]
        %v2330 = vld [vmem:[%s3 + $0x20] sm:$0xff]
        %v2331 = vld [vmem:[%s4] sm:$0x1]
        %v2333 = vlaneseq
        %v2334 = vshrl.u32 %v2333, 7
        %v2335 = vsub.s32 0, %v2334
        %v2336 = vrot.slane %v2331, %v2335
        %vm2338 = vcmask 326656
        %v2340 = vsel %vm2338, %v2318, 0
        %v2343 = vsel %vm2338, %v2319, 0
        %v2346 = vsel %vm2338, %v2320, 0
        %v2349 = vsel %vm2338, %v2321, 0
        %v2352 = vsel %vm2338, %v2322, 0
        %v2355 = vsel %vm2338, %v2323, 0
        %v2358 = vsel %vm2338, %v2324, 0
        %v2361 = vsel %vm2338, %v2325, 0
        %2363 = vmatprep.subr.mxu0 0.0
        %2364 = vmatpush1.msra.mxu0 %v2326
        %2365 = vmatprep.subr.mxu0 0.0
        %2366 = vmatpush1.msra.mxu0 %v2327
        %2367 = vmatprep.subr.mxu0 0.0
        %2368 = vmatpush1.msra.mxu0 %v2328
        %2369 = vmatprep.subr.mxu0 0.0
        %2370 = vmatpush1.msra.mxu0 %v2329
        %2371 = vmatprep.subr.mxu0 0.0
        %2372 = vmatpush1.msra.mxu0 %v2330
        %2373 = vmatprep.subr.mxu0 0.0
        %2374 = vmatpush1.msra.mxu0 0.0
        %2375 = vmatprep.subr.mxu0 0.0
        %2376 = vmatpush1.msra.mxu0 0.0
        %2377 = vmatprep.subr.mxu0 0.0
        %2378 = vmatpush1.msra.mxu0 0.0
        %2379 = vmatprep.subr.mxu0 0.0
        %2380 = vmatpush1.msra.mxu0 0.0
        %2381 = vmatprep.subr.mxu0 0.0
        %2382 = vmatpush1.msra.mxu0 0.0
        %2383 = vmatprep.subr.mxu0 0.0
        %2384 = vmatpush1.msra.mxu0 0.0
        %2385 = vmatprep.subr.mxu0 0.0
        %2386 = vmatpush1.msra.mxu0 0.0
        %2387 = vmatprep.subr.mxu0 0.0
        %2388 = vmatpush1.msra.mxu0 0.0
        %2389 = vmatprep.subr.mxu0 0.0
        %2390 = vmatpush1.msra.mxu0 0.0
        %2391 = vmatprep.subr.mxu0 0.0
        %2392 = vmatpush1.msra.mxu0 0.0
        %2393 = vmatprep.subr.mxu0 0.0
        %2394 = vmatpush1.msra.mxu0 0.0
        %2395 = vmatprep.subr.mxu0 0.0
        %2396 = vmatpush1.msra.mxu0 0.0
        %2397 = vmatprep.subr.mxu0 0.0
        %2398 = vmatpush1.msra.mxu0 0.0
        %2399 = vmatprep.subr.mxu0 0.0
        %2400 = vmatpush1.msra.mxu0 0.0
        %2401 = vmatprep.subr.mxu0 0.0
        %2402 = vmatpush1.msra.mxu0 0.0
        %2403 = vmatprep.subr.mxu0 0.0
        %2404 = vmatpush1.msra.mxu0 0.0
        %2405 = vmatprep.subr.mxu0 0.0
        %2406 = vmatpush1.msra.mxu0 0.0
        %2407 = vmatprep.subr.mxu0 0.0
        %2408 = vmatpush1.msra.mxu0 0.0
        %2409 = vmatprep.subr.mxu0 0.0
        %2410 = vmatpush1.msra.mxu0 0.0
        %2411 = vmatprep.subr.mxu0 0.0
        %2412 = vmatpush1.msra.mxu0 0.0
        %2413 = vmatprep.subr.mxu0 0.0
        %2414 = vmatpush1.msra.mxu0 0.0
        %2415 = vmatprep.subr.mxu0 0.0
        %2416 = vmatpush1.msra.mxu0 0.0
        %2417 = vmatprep.subr.mxu0 0.0
        %2418 = vmatpush1.msra.mxu0 0.0
        %2419 = vmatprep.subr.mxu0 0.0
        %2420 = vmatpush1.msra.mxu0 0.0
        %2421 = vmatprep.subr.mxu0 0.0
        %2422 = vmatpush1.msra.mxu0 0.0
        %2423 = vmatprep.subr.mxu0 0.0
        %2424 = vmatpush1.msra.mxu0 0.0
        %2425 = vmatprep.subr.mxu0 0.0
        %2426 = vmatpush1.msra.mxu0 0.0
        %2427 = vmatprep.mubr.f32.mxu0 0.0
        %2428 = vmatmul.mubr.f32.gmra.mrb[0].mxu0 %v2340
        %v2429 = vpop.f32.mrb[0].mxu0
        %v2430 = vadd.f32 %v2336, %v2429
        %v2431 = vpop.f32.mrb[0].mxu0
        %2432 = vmatprep.mubr.f32.mxu0 0.0
        %2433 = vmatmul.mubr.f32.gmra.mrb[0].mxu0 %v2343
        %v2434 = vpop.f32.mrb[0].mxu0
        %v2435 = vadd.f32 %v2336, %v2434
        %v2436 = vpop.f32.mrb[0].mxu0
        %2437 = vmatprep.mubr.f32.mxu0 0.0
        %2438 = vmatmul.mubr.f32.gmra.mrb[0].mxu0 %v2346
        %v2439 = vpop.f32.mrb[0].mxu0
        %v2440 = vadd.f32 %v2336, %v2439
        %v2441 = vpop.f32.mrb[0].mxu0
        %2442 = vmatprep.mubr.f32.mxu0 0.0
        %2443 = vmatmul.mubr.f32.gmra.mrb[0].mxu0 %v2349
        %v2444 = vpop.f32.mrb[0].mxu0
        %v2445 = vadd.f32 %v2336, %v2444
        %v2446 = vpop.f32.mrb[0].mxu0
        %2447 = vmatprep.mubr.f32.mxu0 0.0
        %2448 = vmatmul.mubr.f32.gmra.mrb[0].mxu0 %v2352
        %v2449 = vpop.f32.mrb[0].mxu0
        %v2450 = vadd.f32 %v2336, %v2449
        %v2451 = vpop.f32.mrb[0].mxu0
        %2452 = vmatprep.mubr.f32.mxu0 0.0
        %2453 = vmatmul.mubr.f32.gmra.mrb[0].mxu0 %v2355
        %v2454 = vpop.f32.mrb[0].mxu0
        %v2455 = vadd.f32 %v2336, %v2454
        %v2456 = vpop.f32.mrb[0].mxu0
        %2457 = vmatprep.mubr.f32.mxu0 0.0
        %2458 = vmatmul.mubr.f32.gmra.mrb[0].mxu0 %v2358
        %v2459 = vpop.f32.mrb[0].mxu0
        %v2460 = vadd.f32 %v2336, %v2459
        %v2461 = vpop.f32.mrb[0].mxu0
        %2462 = vmatprep.mubr.f32.mxu0 0.0
        %2463 = vmatmul.mubr.f32.gmra.mrb[0].mxu0 %v2361
        %v2464 = vpop.f32.mrb[0].mxu0
        %v2465 = vadd.f32 %v2336, %v2464
        %v2466 = vpop.f32.mrb[0].mxu0
        %2467 = vdwg.mxu0
        %v2468 = vmax.f32 %v2430, 0.0
        %v2469 = vmax.f32 %v2435, 0.0
        %v2470 = vmax.f32 %v2440, 0.0
        %v2471 = vmax.f32 %v2445, 0.0
        %v2472 = vmax.f32 %v2450, 0.0
        %v2473 = vmax.f32 %v2455, 0.0
        %v2474 = vmax.f32 %v2460, 0.0
        %v2475 = vmax.f32 %v2465, 0.0
        %v2476 = vld [vmem:[%s410] sm:$0xff]
        %v2477 = vld [vmem:[%s410 + $0x8] sm:$0xff]
        %v2478 = vld [vmem:[%s410 + $0x10] sm:$0xff]
        %v2479 = vld [vmem:[%s410 + $0x18] sm:$0xff]
        %v2480 = vld [vmem:[%s410 + $0x20] sm:$0xff]
        %v2481 = vld [vmem:[%s410 + $0x28] sm:$0xff]
        %v2482 = vld [vmem:[%s410 + $0x30] sm:$0xff]
        %v2483 = vld [vmem:[%s410 + $0x38] sm:$0xff]
        %2485 = vset.pattern.permute.xlu0 0
        %2486 = vperm.xlu0 %2485, %v2476
        %v2487 = vpop.permute.xlu0 %2486
        %2490 = vset.pattern.permute.xlu0 0
        %2491 = vperm.xlu0 %2490, %v2477
        %v2492 = vpop.permute.xlu0 %2491
        %2495 = vset.pattern.permute.xlu0 0
        %2496 = vperm.xlu0 %2495, %v2478
        %v2497 = vpop.permute.xlu0 %2496
        %2500 = vset.pattern.permute.xlu0 0
        %2501 = vperm.xlu0 %2500, %v2479
        %v2502 = vpop.permute.xlu0 %2501
        %2505 = vset.pattern.permute.xlu0 0
        %2506 = vperm.xlu0 %2505, %v2480
        %v2507 = vpop.permute.xlu0 %2506
        %2510 = vset.pattern.permute.xlu0 0
        %2511 = vperm.xlu0 %2510, %v2481
        %v2512 = vpop.permute.xlu0 %2511
        %2515 = vset.pattern.permute.xlu0 0
        %2516 = vperm.xlu0 %2515, %v2482
        %v2517 = vpop.permute.xlu0 %2516
        %2520 = vset.pattern.permute.xlu0 0
        %2521 = vperm.xlu0 %2520, %v2483
        %v2522 = vpop.permute.xlu0 %2521
        %v2524 = vadd.f32 %v2468, %v2487
        %v2525 = vadd.f32 %v2469, %v2492
        %v2526 = vadd.f32 %v2470, %v2497
        %v2527 = vadd.f32 %v2471, %v2502
        %v2528 = vadd.f32 %v2472, %v2507
        %v2529 = vadd.f32 %v2473, %v2512
        %v2530 = vadd.f32 %v2474, %v2517
        %v2531 = vadd.f32 %v2475, %v2522
        %v2532 = vld [vmem:[#allocation2] sm:$0xff]
        %v2533 = vrot.slane %v2524, 4
        %v2534 = vmax.f32 %v2524, %v2533
        %v2535 = vrot.slane %v2534, 2
        %v2536 = vmax.f32 %v2534, %v2535
        %v2537 = vrot.slane %v2536, 1
        %v2538 = vmax.f32 %v2536, %v2537
        %v2539 = vrot.slane %v2525, 4
        %v2540 = vmax.f32 %v2525, %v2539
        %v2541 = vrot.slane %v2540, 2
        %v2542 = vmax.f32 %v2540, %v2541
        %v2543 = vrot.slane %v2542, 1
        %v2544 = vmax.f32 %v2542, %v2543
        %v2545 = vrot.slane %v2526, 4
        %v2546 = vmax.f32 %v2526, %v2545
        %v2547 = vrot.slane %v2546, 2
        %v2548 = vmax.f32 %v2546, %v2547
        %v2549 = vrot.slane %v2548, 1
        %v2550 = vmax.f32 %v2548, %v2549
        %v2551 = vrot.slane %v2527, 4
        %v2552 = vmax.f32 %v2527, %v2551
        %v2553 = vrot.slane %v2552, 2
        %v2554 = vmax.f32 %v2552, %v2553
        %v2555 = vrot.slane %v2554, 1
        %v2556 = vmax.f32 %v2554, %v2555
        %v2557 = vrot.slane %v2528, 4
        %v2558 = vmax.f32 %v2528, %v2557
        %v2559 = vrot.slane %v2558, 2
        %v2560 = vmax.f32 %v2558, %v2559
        %v2561 = vrot.slane %v2560, 1
        %v2562 = vmax.f32 %v2560, %v2561
        %v2563 = vrot.slane %v2529, 4
        %v2564 = vmax.f32 %v2529, %v2563
        %v2565 = vrot.slane %v2564, 2
        %v2566 = vmax.f32 %v2564, %v2565
        %v2567 = vrot.slane %v2566, 1
        %v2568 = vmax.f32 %v2566, %v2567
        %v2569 = vrot.slane %v2530, 4
        %v2570 = vmax.f32 %v2530, %v2569
        %v2571 = vrot.slane %v2570, 2
        %v2572 = vmax.f32 %v2570, %v2571
        %v2573 = vrot.slane %v2572, 1
        %v2574 = vmax.f32 %v2572, %v2573
        %v2575 = vrot.slane %v2531, 4
        %v2576 = vmax.f32 %v2531, %v2575
        %v2577 = vrot.slane %v2576, 2
        %v2578 = vmax.f32 %v2576, %v2577
        %v2579 = vrot.slane %v2578, 1
        %v2580 = vmax.f32 %v2578, %v2579
        %vm2589 = vcmask 1041409
        %v2590 = vsel %vm2589, %v2544, %v2538
        %vm2591 = vcmask 1042434
        %v2592 = vsel %vm2591, %v2550, %v2590
        %vm2593 = vcmask 1043459
        %v2594 = vsel %vm2593, %v2556, %v2592
        %vm2595 = vcmask 1044484
        %v2596 = vsel %vm2595, %v2562, %v2594
        %vm2597 = vcmask 1045509
        %v2598 = vsel %vm2597, %v2568, %v2596
        %vm2599 = vcmask 1046534
        %v2600 = vsel %vm2599, %v2574, %v2598
        %vm2601 = vcmask 1047559
        %v2602 = vsel %vm2601, %v2580, %v2600
        %v2604 = vmax.f32 %v2532, %v2602
        %2605 = vst [vmem:[#allocation2] sm:$0xff] %v2604
        %p2606 = scmp.eq.s32.totalorder %s26, 1
        // Predicated region
        $region129: #{pointconv.1} parent=115 // pred_check
          %p2607 = pneg %p2606
        $region130: #{pointconv.1} parent=115 // pred_check_branch
          %2609 = sbr.rel (%p2607) target = $region132
        $region131: #{pointconv.1} parent=115 // pred_region
          %v2610 = vld [vmem:[#allocation2] sm:$0xff]
          %v2611 = vld [vmem:[%s5] sm:$0xff]
          %v2612 = vld [vmem:[%s5 + $0x8] sm:$0xff]
          %v2613 = vld [vmem:[%s5 + $0x10] sm:$0xff]
          %v2614 = vld [vmem:[%s5 + $0x18] sm:$0xff]
          %v2615 = vld [vmem:[%s5 + $0x20] sm:$0xff]
          %v2616 = vld [vmem:[%s5 + $0x28] sm:$0xff]
          %v2617 = vld [vmem:[%s5 + $0x30] sm:$0xff]
          %v2618 = vld [vmem:[%s5 + $0x38] sm:$0xff]
          %v2619 = vld [vmem:[%s5 + $0x40] sm:$0xff]
          %v2620 = vld [vmem:[%s5 + $0x48] sm:$0xff]
          %v2621 = vld [vmem:[%s5 + $0x50] sm:$0xff]
          %v2622 = vld [vmem:[%s5 + $0x58] sm:$0xff]
          %v2623 = vld [vmem:[%s5 + $0x60] sm:$0xff]
          %v2624 = vld [vmem:[%s5 + $0x68] sm:$0xff]
          %v2625 = vld [vmem:[%s5 + $0x70] sm:$0xff]
          %v2626 = vld [vmem:[%s5 + $0x78] sm:$0xff]
          %v2627 = vld [vmem:[%s6] sm:$0x1]
          %v2629 = vlaneseq
          %v2630 = vshrl.u32 %v2629, 7
          %v2631 = vsub.s32 0, %v2630
          %v2632 = vrot.slane %v2627, %v2631
          %2634 = vmatprep.subr.mxu0 0.0
          %2635 = vmatpush1.msra.mxu0 %v2611
          %2636 = vmatprep.subr.mxu0 0.0
          %2637 = vmatpush1.msra.mxu0 %v2612
          %2638 = vmatprep.subr.mxu0 0.0
          %2639 = vmatpush1.msra.mxu0 %v2613
          %2640 = vmatprep.subr.mxu0 0.0
          %2641 = vmatpush1.msra.mxu0 %v2614
          %2642 = vmatprep.subr.mxu0 0.0
          %2643 = vmatpush1.msra.mxu0 %v2615
          %2644 = vmatprep.subr.mxu0 0.0
          %2645 = vmatpush1.msra.mxu0 %v2616
          %2646 = vmatprep.subr.mxu0 0.0
          %2647 = vmatpush1.msra.mxu0 %v2617
          %2648 = vmatprep.subr.mxu0 0.0
          %2649 = vmatpush1.msra.mxu0 %v2618
          %2650 = vmatprep.subr.mxu0 0.0
          %2651 = vmatpush1.msra.mxu0 %v2619
          %2652 = vmatprep.subr.mxu0 0.0
          %2653 = vmatpush1.msra.mxu0 %v2620
          %2654 = vmatprep.subr.mxu0 0.0
          %2655 = vmatpush1.msra.mxu0 %v2621
          %2656 = vmatprep.subr.mxu0 0.0
          %2657 = vmatpush1.msra.mxu0 %v2622
          %2658 = vmatprep.subr.mxu0 0.0
          %2659 = vmatpush1.msra.mxu0 %v2623
          %2660 = vmatprep.subr.mxu0 0.0
          %2661 = vmatpush1.msra.mxu0 %v2624
          %2662 = vmatprep.subr.mxu0 0.0
          %2663 = vmatpush1.msra.mxu0 %v2625
          %2664 = vmatprep.subr.mxu0 0.0
          %2665 = vmatpush1.msra.mxu0 %v2626
          %2666 = vmatprep.subr.mxu0 0.0
          %2667 = vmatpush1.msra.mxu0 0.0
          %2668 = vmatprep.subr.mxu0 0.0
          %2669 = vmatpush1.msra.mxu0 0.0
          %2670 = vmatprep.subr.mxu0 0.0
          %2671 = vmatpush1.msra.mxu0 0.0
          %2672 = vmatprep.subr.mxu0 0.0
          %2673 = vmatpush1.msra.mxu0 0.0
          %2674 = vmatprep.subr.mxu0 0.0
          %2675 = vmatpush1.msra.mxu0 0.0
          %2676 = vmatprep.subr.mxu0 0.0
          %2677 = vmatpush1.msra.mxu0 0.0
          %2678 = vmatprep.subr.mxu0 0.0
          %2679 = vmatpush1.msra.mxu0 0.0
          %2680 = vmatprep.subr.mxu0 0.0
          %2681 = vmatpush1.msra.mxu0 0.0
          %2682 = vmatprep.subr.mxu0 0.0
          %2683 = vmatpush1.msra.mxu0 0.0
          %2684 = vmatprep.subr.mxu0 0.0
          %2685 = vmatpush1.msra.mxu0 0.0
          %2686 = vmatprep.subr.mxu0 0.0
          %2687 = vmatpush1.msra.mxu0 0.0
          %2688 = vmatprep.subr.mxu0 0.0
          %2689 = vmatpush1.msra.mxu0 0.0
          %2690 = vmatprep.subr.mxu0 0.0
          %2691 = vmatpush1.msra.mxu0 0.0
          %2692 = vmatprep.subr.mxu0 0.0
          %2693 = vmatpush1.msra.mxu0 0.0
          %2694 = vmatprep.subr.mxu0 0.0
          %2695 = vmatpush1.msra.mxu0 0.0
          %2696 = vmatprep.subr.mxu0 0.0
          %2697 = vmatpush1.msra.mxu0 0.0
          %2698 = vmatprep.mubr.f32.mxu0 0.0
          %2699 = vmatmul.mubr.f32.gmra.mrb[0].mxu0 %v2610
          %v2700 = vpop.f32.mrb[0].mxu0
          %v2701 = vadd.f32 %v2632, %v2700
          %v2702 = vpop.f32.mrb[0].mxu0
          %2703 = vdwg.mxu0
          %2704 = vst [vmem:[%s442] sm:$0xff] %v2701
        $region132: #{pointconv.1} parent=115 // pred_fallthru
          _
        %s2705 = sand.u32 %s202, 1
        %s2706 = scalar_lea.sflag [#allocation6], %s2705
        %s2707 = sand.u32 %s202, 1
        %s2708 = smul.addr %s2707, 8
        %s2709 = scalar_lea.vmem [#allocation5], %s2708
        // Predicated region
        $region133: #{pointconv.1} parent=115 // pred_check
          %p2710 = pneg %p212
        $region134: #{pointconv.1} parent=115 // pred_check_branch
          %2712 = sbr.rel (%p2710) target = $region136
        $region135: #{pointconv.1} parent=115 // pred_region
          %s2714 = ssub.s32 128, 128
          %2715 = vsyncadd %s2706, %s2714
          %s2716 = smul.addr %s25, 128
          %s2717 = scalar_lea.hbm %s7, %s2716
          %s2719 = sshll.u32 %s2709, 4
          %s2720 = int_to_ptr.vmem [resolvable:$true] %s2719
          %2722 = dma.vmem_to_hbm [thread:$0]  %s2720, 128, %s2717, %s2706
        $region136: #{pointconv.1} parent=115 // pred_fallthru
          _
      $region116: #{pointconv.1} parent=5 // pred_fallthru
        _
      %p2723 = scmp.le.s32.totalorder 2, %s16
      // Predicated region
      $region137: #{pointconv.1} parent=5 // pred_check
        %p2724 = pneg %p2723
      $region138: #{pointconv.1} parent=5 // pred_check_branch
        %2726 = sbr.rel (%p2724) target = $region140
      $region139: #{pointconv.1} parent=5 // pred_region
        %s2727 = ssub.s32 %s16, 2
        // Predicated region
        $region141: #{pointconv.1} parent=139 // pred_check
          %p2728 = pneg %p218
        $region142: #{pointconv.1} parent=139 // pred_check_branch
          %2730 = sbr.rel (%p2728) target = $region144
        $region143: #{pointconv.1} parent=139 // pred_region
          %s2731 = sand.u32 %s203, 1
          %s2732 = scalar_lea.sflag [#allocation6], %s2731
          %s2733 = sand.u32 %s203, 1
          %s2734 = smul.addr %s2733, 8
          %s2735 = scalar_lea.vmem [#allocation5], %s2734
          %2736 = dma.done %s2732, 128
        $region144: #{pointconv.1} parent=139 // pred_fallthru
          _
      $region140: #{pointconv.1} parent=5 // pred_fallthru
        _
    $region6: #{pointconv.1} parent=1 // loop_footer
      %s20 = sadd.s32 1, %s16
    $region7: #{pointconv.1} parent=1 // loop_footer_branch
      %15 = sbr.rel target = $region3
    $region8: #{pointconv.1} parent=1 // loop_exit
      _
    %2737 = vsyncpa [#allocation6], 1
    %s2738 = scalar_lea.sflag [#allocation6], 1
    %2739 = vsyncpa %s2738, 1

</llo_original>
